<compile_context>
chip_gen: v7x
topology: tpu7x:2x2x1
jax: 0.10.0
libtpu: 0.0.40
codegen_flags: <defaults>
</compile_context>

<pallas_src>
import numpy as np
import jax
import jax.numpy as jnp
from jax import lax
from jax.experimental import pallas as pl
from jax.experimental.pallas import tpu as pltpu


def encoder_gru_kernel(x_ref,       # (T, B, I)   time-major input
                       w_ih_ref,    # (I, 3*Hp)   gate-padded weight_ih.T
                       b_gi_ref,    # (1, 3*Hp)   folded input-side bias
                       w_hh_ref,    # (Hp, 3*Hp)  gate-padded weight_hh.T
                       b_gh_ref,    # (1, 3*Hp)   zeros except n-gate = b_hn
                       w_head_ref,  # (Hp, 2L)    [fc_mu.T | fc_var.T]
                       b_head_ref,  # (1, 2L)
                       out_ref):    # (B, 2L)     [mu | logvar]
    T, B, _ = x_ref.shape
    Hp = w_hh_ref.shape[0]          # padded hidden width (multiple of 128)

    w_ih = w_ih_ref[...]
    b_gi = b_gi_ref[...]
    w_hh = w_hh_ref[...]
    b_gh = b_gh_ref[...]

    # --- Hoisted input projection: no dependence on h, off the serial chain. ---
    gi_all = [jnp.dot(x_ref[t], w_ih, preferred_element_type=jnp.float32) + b_gi
              for t in range(T)]                                  # T x (B, 3Hp)

    # --- Recurrence: fully unrolled, h carried in vregs. ---
    # Padded lanes stay exactly zero: gi/gh pads are 0 -> r,z pads = 0.5,
    # n pad = 0, so h pad = 0.5 * h_prev_pad = 0 forever.
    h = jnp.zeros((B, Hp), dtype=jnp.float32)
    for t in range(T):
        gi = gi_all[t]                                            # (B, 3Hp)
        gh = jnp.dot(h, w_hh, preferred_element_type=jnp.float32) + b_gh
        # PyTorch gate order: r, z, n (gates live at lane offsets 0/Hp/2Hp)
        rz = jax.nn.sigmoid(gi[:, :2 * Hp] + gh[:, :2 * Hp])      # fused r,z sigmoid
        r = rz[:, :Hp]
        z = rz[:, Hp:]
        n = jnp.tanh(gi[:, 2 * Hp:] + r * gh[:, 2 * Hp:])         # n = tanh(i_n + r*(h@W_hn + b_hn))
        h = (1.0 - z) * n + z * h

    # --- Fused output heads: one matmul, one store. ---
    out_ref[...] = (jnp.dot(h, w_head_ref[...], preferred_element_type=jnp.float32)
                    + b_head_ref[...]).astype(out_ref.dtype)


def _pad_gate_cols(w, H, Hp):
    """(rows, 3H) -> (rows, 3Hp): each gate block padded to Hp lanes with zeros."""
    parts = [w[:, g * H:(g + 1) * H] for g in range(3)]
    parts = [jnp.pad(p, ((0, 0), (0, Hp - H))) for p in parts]
    return jnp.concatenate(parts, axis=1)


def _pad_gate_bias(b, H, Hp):
    """(3H,) -> (3Hp,): each gate segment padded to Hp with zeros."""
    parts = [b[g * H:(g + 1) * H] for g in range(3)]
    parts = [jnp.pad(p, (0, Hp - H)) for p in parts]
    return jnp.concatenate(parts)


def encoder_forward(x, params):
    """x: (B, T, I) float32 (batch_first, like the PyTorch module). Returns (mu, logvar)."""
    B, T, I = x.shape
    H = params["w_hh"].shape[1]
    L = params["w_mu"].shape[0]
    Hp = ((H + 127) // 128) * 128          # pad hidden width so gates are lane-aligned

    x_tm = jnp.transpose(x, (1, 0, 2)).astype(jnp.float32)        # (T, B, I)

    w_ih_t = params["w_ih"].T.astype(jnp.float32)                 # (I, 3H)
    w_hh_t = params["w_hh"].T.astype(jnp.float32)                 # (H, 3H)
    b_ih = params["b_ih"].astype(jnp.float32)
    b_hh = params["b_hh"].astype(jnp.float32)

    w_ih_p = _pad_gate_cols(w_ih_t, H, Hp)                        # (I, 3Hp)
    w_hh_p = jnp.pad(_pad_gate_cols(w_hh_t, H, Hp),
                     ((0, Hp - H), (0, 0)))                       # (Hp, 3Hp)

    # Fold biases: r/z get (b_i + b_h) on the input side; n keeps b_hn on hidden side.
    b_gi = jnp.concatenate([b_ih[0:H] + b_hh[0:H],
                            b_ih[H:2 * H] + b_hh[H:2 * H],
                            b_ih[2 * H:3 * H]])
    b_gi_p = _pad_gate_bias(b_gi, H, Hp).reshape(1, 3 * Hp)
    b_gh = jnp.concatenate([jnp.zeros((2 * H,), jnp.float32), b_hh[2 * H:3 * H]])
    b_gh_p = _pad_gate_bias(b_gh, H, Hp).reshape(1, 3 * Hp)

    # Fused output heads.
    w_head = jnp.concatenate([params["w_mu"].T, params["w_var"].T],
                             axis=1).astype(jnp.float32)          # (H, 2L)
    w_head_p = jnp.pad(w_head, ((0, Hp - H), (0, 0)))             # (Hp, 2L)
    b_head = jnp.concatenate([params["b_mu"], params["b_var"]]
                             ).astype(jnp.float32).reshape(1, 2 * L)

    vmem = pl.BlockSpec(memory_space=pltpu.MemorySpace.VMEM)
    out = pl.pallas_call(
        encoder_gru_kernel,
        out_shape=jax.ShapeDtypeStruct((B, 2 * L), jnp.float32),
        in_specs=[vmem] * 7,
        out_specs=vmem,
    )(x_tm, w_ih_p, b_gi_p, w_hh_p, b_gh_p, w_head_p, b_head)

    return out[:, :L], out[:, L:]


def init_params(key, node_type=8, max_seq_len=8, hidden_size=32, latent_dim=16):
    """Deterministic synthetic parameters with the shapes implied by Encoder.__init__."""
    I = node_type + max_seq_len
    H = hidden_size
    L = latent_dim
    ks = jax.random.split(key, 8)
    s = 1.0 / np.sqrt(H)  # PyTorch GRU / Linear(H, L) both use U(-1/sqrt(H), 1/sqrt(H))

    def u(k, shape):
        return jax.random.uniform(k, shape, jnp.float32, -s, s)

    return dict(
        w_ih=u(ks[0], (3 * H, I)),
        w_hh=u(ks[1], (3 * H, H)),
        b_ih=u(ks[2], (3 * H,)),
        b_hh=u(ks[3], (3 * H,)),
        w_mu=u(ks[4], (L, H)),
        b_mu=u(ks[5], (L,)),
        w_var=u(ks[6], (L, H)),
        b_var=u(ks[7], (L,)),
    )


def _reference_forward(x, p):
    """Pure-JAX reference of the same GRU + linear heads (for correctness check)."""
    H = p["w_hh"].shape[1]

    def cell(h, x_t):
        gi = x_t @ p["w_ih"].T + p["b_ih"]
        gh = h @ p["w_hh"].T + p["b_hh"]
        i_r, i_z, i_n = gi[:, :H], gi[:, H:2 * H], gi[:, 2 * H:]
        h_r, h_z, h_n = gh[:, :H], gh[:, H:2 * H], gh[:, 2 * H:]
        r = jax.nn.sigmoid(i_r + h_r)
        z = jax.nn.sigmoid(i_z + h_z)
        n = jnp.tanh(i_n + r * h_n)
        return (1.0 - z) * n + z * h, None

    h0 = jnp.zeros((x.shape[0], H), jnp.float32)
    h_n, _ = lax.scan(cell, h0, jnp.transpose(x, (1, 0, 2)))
    mu = h_n @ p["w_mu"].T + p["b_mu"]
    logvar = h_n @ p["w_var"].T + p["b_var"]
    return mu, logvar


if __name__ == "__main__":
    # Small shapes consistent with the module: node_type=8, max_seq_len=8 -> inp_dim=16,
    # seq len T=8, batch B=2, hidden=32, latent=16.
    key = jax.random.PRNGKey(0)
    k_param, k_x = jax.random.split(key)

    node_type, max_seq_len, hidden, latent = 8, 8, 32, 16
    B, T, I = 2, max_seq_len, node_type + max_seq_len

    params = init_params(k_param, node_type, max_seq_len, hidden, latent)
    x = jax.random.normal(k_x, (B, T, I), jnp.float32)

    mu, logvar = encoder_forward(x, params)
    jax.block_until_ready((mu, logvar))

    # sanity check against pure-JAX reference
    mu_ref, logvar_ref = _reference_forward(x, params)
    np.testing.assert_allclose(np.asarray(mu), np.asarray(mu_ref), rtol=1e-5, atol=1e-5)
    np.testing.assert_allclose(np.asarray(logvar), np.asarray(logvar_ref), rtol=1e-5, atol=1e-5)

    print("KERNEL_OK")
</pallas_src>

<mosaic_0001>
module attributes {stable_mosaic.version = 11 : i64} {
  func.func @encoder_gru_kernel(%arg0: memref<8x2x16xf32, #tpu.memory_space<vmem>>, %arg1: memref<16x384xf32, #tpu.memory_space<vmem>>, %arg2: memref<1x384xf32, #tpu.memory_space<vmem>>, %arg3: memref<128x384xf32, #tpu.memory_space<vmem>>, %arg4: memref<1x384xf32, #tpu.memory_space<vmem>>, %arg5: memref<128x32xf32, #tpu.memory_space<vmem>>, %arg6: memref<1x32xf32, #tpu.memory_space<vmem>>, %arg7: memref<2x32xf32, #tpu.memory_space<vmem>>) attributes {dimension_semantics = [], scalar_prefetch = 0 : i64, scratch_operands = 0 : i64, tpu.core_type = #tpu.core_type<tc>} {
    %c0 = arith.constant 0 : index
    %c0_0 = arith.constant 0 : index
    %0 = vector.load %arg1[%c0, %c0_0] : memref<16x384xf32, #tpu.memory_space<vmem>>, vector<16x384xf32>
    %c0_1 = arith.constant 0 : index
    %c0_2 = arith.constant 0 : index
    %1 = vector.load %arg2[%c0_1, %c0_2] : memref<1x384xf32, #tpu.memory_space<vmem>>, vector<1x384xf32>
    %c0_3 = arith.constant 0 : index
    %c0_4 = arith.constant 0 : index
    %2 = vector.load %arg3[%c0_3, %c0_4] : memref<128x384xf32, #tpu.memory_space<vmem>>, vector<128x384xf32>
    %c0_5 = arith.constant 0 : index
    %c0_6 = arith.constant 0 : index
    %3 = vector.load %arg4[%c0_5, %c0_6] : memref<1x384xf32, #tpu.memory_space<vmem>>, vector<1x384xf32>
    %c0_7 = arith.constant 0 : index
    %c0_8 = arith.constant 0 : index
    %c0_9 = arith.constant 0 : index
    %4 = vector.load %arg0[%c0_7, %c0_8, %c0_9] : memref<8x2x16xf32, #tpu.memory_space<vmem>>, vector<1x2x16xf32>
    %5 = vector.shape_cast %4 : vector<1x2x16xf32> to vector<2x16xf32>
    %cst = arith.constant dense<0.000000e+00> : vector<2x384xf32>
    %6 = tpu.matmul %5, %0, %cst {dimension_numbers = #tpu.dot_dimension_numbers<[1], [0], [0], [1], [0, 0, 1, 1], [], []>} : vector<2x16xf32>, vector<16x384xf32>, vector<2x384xf32> -> vector<2x384xf32>
    %7 = vector.broadcast %1 : vector<1x384xf32> to vector<2x384xf32>
    %8 = arith.addf %6, %7 : vector<2x384xf32>
    %c1 = arith.constant 1 : index
    %c0_10 = arith.constant 0 : index
    %c0_11 = arith.constant 0 : index
    %9 = vector.load %arg0[%c1, %c0_10, %c0_11] : memref<8x2x16xf32, #tpu.memory_space<vmem>>, vector<1x2x16xf32>
    %10 = vector.shape_cast %9 : vector<1x2x16xf32> to vector<2x16xf32>
    %cst_12 = arith.constant dense<0.000000e+00> : vector<2x384xf32>
    %11 = tpu.matmul %10, %0, %cst_12 {dimension_numbers = #tpu.dot_dimension_numbers<[1], [0], [0], [1], [0, 0, 1, 1], [], []>} : vector<2x16xf32>, vector<16x384xf32>, vector<2x384xf32> -> vector<2x384xf32>
    %12 = vector.broadcast %1 : vector<1x384xf32> to vector<2x384xf32>
    %13 = arith.addf %11, %12 : vector<2x384xf32>
    %c2 = arith.constant 2 : index
    %c0_13 = arith.constant 0 : index
    %c0_14 = arith.constant 0 : index
    %14 = vector.load %arg0[%c2, %c0_13, %c0_14] : memref<8x2x16xf32, #tpu.memory_space<vmem>>, vector<1x2x16xf32>
    %15 = vector.shape_cast %14 : vector<1x2x16xf32> to vector<2x16xf32>
    %cst_15 = arith.constant dense<0.000000e+00> : vector<2x384xf32>
    %16 = tpu.matmul %15, %0, %cst_15 {dimension_numbers = #tpu.dot_dimension_numbers<[1], [0], [0], [1], [0, 0, 1, 1], [], []>} : vector<2x16xf32>, vector<16x384xf32>, vector<2x384xf32> -> vector<2x384xf32>
    %17 = vector.broadcast %1 : vector<1x384xf32> to vector<2x384xf32>
    %18 = arith.addf %16, %17 : vector<2x384xf32>
    %c3 = arith.constant 3 : index
    %c0_16 = arith.constant 0 : index
    %c0_17 = arith.constant 0 : index
    %19 = vector.load %arg0[%c3, %c0_16, %c0_17] : memref<8x2x16xf32, #tpu.memory_space<vmem>>, vector<1x2x16xf32>
    %20 = vector.shape_cast %19 : vector<1x2x16xf32> to vector<2x16xf32>
    %cst_18 = arith.constant dense<0.000000e+00> : vector<2x384xf32>
    %21 = tpu.matmul %20, %0, %cst_18 {dimension_numbers = #tpu.dot_dimension_numbers<[1], [0], [0], [1], [0, 0, 1, 1], [], []>} : vector<2x16xf32>, vector<16x384xf32>, vector<2x384xf32> -> vector<2x384xf32>
    %22 = vector.broadcast %1 : vector<1x384xf32> to vector<2x384xf32>
    %23 = arith.addf %21, %22 : vector<2x384xf32>
    %c4 = arith.constant 4 : index
    %c0_19 = arith.constant 0 : index
    %c0_20 = arith.constant 0 : index
    %24 = vector.load %arg0[%c4, %c0_19, %c0_20] : memref<8x2x16xf32, #tpu.memory_space<vmem>>, vector<1x2x16xf32>
    %25 = vector.shape_cast %24 : vector<1x2x16xf32> to vector<2x16xf32>
    %cst_21 = arith.constant dense<0.000000e+00> : vector<2x384xf32>
    %26 = tpu.matmul %25, %0, %cst_21 {dimension_numbers = #tpu.dot_dimension_numbers<[1], [0], [0], [1], [0, 0, 1, 1], [], []>} : vector<2x16xf32>, vector<16x384xf32>, vector<2x384xf32> -> vector<2x384xf32>
    %27 = vector.broadcast %1 : vector<1x384xf32> to vector<2x384xf32>
    %28 = arith.addf %26, %27 : vector<2x384xf32>
    %c5 = arith.constant 5 : index
    %c0_22 = arith.constant 0 : index
    %c0_23 = arith.constant 0 : index
    %29 = vector.load %arg0[%c5, %c0_22, %c0_23] : memref<8x2x16xf32, #tpu.memory_space<vmem>>, vector<1x2x16xf32>
    %30 = vector.shape_cast %29 : vector<1x2x16xf32> to vector<2x16xf32>
    %cst_24 = arith.constant dense<0.000000e+00> : vector<2x384xf32>
    %31 = tpu.matmul %30, %0, %cst_24 {dimension_numbers = #tpu.dot_dimension_numbers<[1], [0], [0], [1], [0, 0, 1, 1], [], []>} : vector<2x16xf32>, vector<16x384xf32>, vector<2x384xf32> -> vector<2x384xf32>
    %32 = vector.broadcast %1 : vector<1x384xf32> to vector<2x384xf32>
    %33 = arith.addf %31, %32 : vector<2x384xf32>
    %c6 = arith.constant 6 : index
    %c0_25 = arith.constant 0 : index
    %c0_26 = arith.constant 0 : index
    %34 = vector.load %arg0[%c6, %c0_25, %c0_26] : memref<8x2x16xf32, #tpu.memory_space<vmem>>, vector<1x2x16xf32>
    %35 = vector.shape_cast %34 : vector<1x2x16xf32> to vector<2x16xf32>
    %cst_27 = arith.constant dense<0.000000e+00> : vector<2x384xf32>
    %36 = tpu.matmul %35, %0, %cst_27 {dimension_numbers = #tpu.dot_dimension_numbers<[1], [0], [0], [1], [0, 0, 1, 1], [], []>} : vector<2x16xf32>, vector<16x384xf32>, vector<2x384xf32> -> vector<2x384xf32>
    %37 = vector.broadcast %1 : vector<1x384xf32> to vector<2x384xf32>
    %38 = arith.addf %36, %37 : vector<2x384xf32>
    %c7 = arith.constant 7 : index
    %c0_28 = arith.constant 0 : index
    %c0_29 = arith.constant 0 : index
    %39 = vector.load %arg0[%c7, %c0_28, %c0_29] : memref<8x2x16xf32, #tpu.memory_space<vmem>>, vector<1x2x16xf32>
    %40 = vector.shape_cast %39 : vector<1x2x16xf32> to vector<2x16xf32>
    %cst_30 = arith.constant dense<0.000000e+00> : vector<2x384xf32>
    %41 = tpu.matmul %40, %0, %cst_30 {dimension_numbers = #tpu.dot_dimension_numbers<[1], [0], [0], [1], [0, 0, 1, 1], [], []>} : vector<2x16xf32>, vector<16x384xf32>, vector<2x384xf32> -> vector<2x384xf32>
    %42 = vector.broadcast %1 : vector<1x384xf32> to vector<2x384xf32>
    %43 = arith.addf %41, %42 : vector<2x384xf32>
    %cst_31 = arith.constant 0.000000e+00 : f32
    %44 = vector.broadcast %cst_31 : f32 to vector<2x128xf32>
    %cst_32 = arith.constant dense<0.000000e+00> : vector<2x384xf32>
    %45 = tpu.matmul %44, %2, %cst_32 {dimension_numbers = #tpu.dot_dimension_numbers<[1], [0], [0], [1], [0, 0, 1, 1], [], []>} : vector<2x128xf32>, vector<128x384xf32>, vector<2x384xf32> -> vector<2x384xf32>
    %46 = vector.broadcast %3 : vector<1x384xf32> to vector<2x384xf32>
    %47 = arith.addf %45, %46 : vector<2x384xf32>
    %48 = vector.extract_strided_slice %8 {offsets = [0, 0], sizes = [2, 256], strides = [1, 1]} : vector<2x384xf32> to vector<2x256xf32>
    %49 = vector.extract_strided_slice %47 {offsets = [0, 0], sizes = [2, 256], strides = [1, 1]} : vector<2x384xf32> to vector<2x256xf32>
    %50 = arith.addf %48, %49 : vector<2x256xf32>
    %51 = arith.negf %50 : vector<2x256xf32>
    %52 = math.exp %51 : vector<2x256xf32>
    %cst_33 = arith.constant 1.000000e+00 : f32
    %53 = vector.broadcast %cst_33 : f32 to vector<2x256xf32>
    %54 = arith.addf %53, %52 : vector<2x256xf32>
    %55 = arith.divf %53, %54 : vector<2x256xf32>
    %56 = vector.extract_strided_slice %55 {offsets = [0, 0], sizes = [2, 128], strides = [1, 1]} : vector<2x256xf32> to vector<2x128xf32>
    %57 = vector.extract_strided_slice %55 {offsets = [0, 128], sizes = [2, 128], strides = [1, 1]} : vector<2x256xf32> to vector<2x128xf32>
    %58 = vector.extract_strided_slice %8 {offsets = [0, 256], sizes = [2, 128], strides = [1, 1]} : vector<2x384xf32> to vector<2x128xf32>
    %59 = vector.extract_strided_slice %47 {offsets = [0, 256], sizes = [2, 128], strides = [1, 1]} : vector<2x384xf32> to vector<2x128xf32>
    %60 = arith.mulf %56, %59 : vector<2x128xf32>
    %61 = arith.addf %58, %60 : vector<2x128xf32>
    %62 = math.tanh %61 : vector<2x128xf32>
    %cst_34 = arith.constant 1.000000e+00 : f32
    %63 = vector.broadcast %cst_34 : f32 to vector<2x128xf32>
    %64 = arith.subf %63, %57 : vector<2x128xf32>
    %65 = arith.mulf %64, %62 : vector<2x128xf32>
    %66 = arith.mulf %57, %44 : vector<2x128xf32>
    %67 = arith.addf %65, %66 : vector<2x128xf32>
    %cst_35 = arith.constant dense<0.000000e+00> : vector<2x384xf32>
    %68 = tpu.matmul %67, %2, %cst_35 {dimension_numbers = #tpu.dot_dimension_numbers<[1], [0], [0], [1], [0, 0, 1, 1], [], []>} : vector<2x128xf32>, vector<128x384xf32>, vector<2x384xf32> -> vector<2x384xf32>
    %69 = vector.broadcast %3 : vector<1x384xf32> to vector<2x384xf32>
    %70 = arith.addf %68, %69 : vector<2x384xf32>
    %71 = vector.extract_strided_slice %13 {offsets = [0, 0], sizes = [2, 256], strides = [1, 1]} : vector<2x384xf32> to vector<2x256xf32>
    %72 = vector.extract_strided_slice %70 {offsets = [0, 0], sizes = [2, 256], strides = [1, 1]} : vector<2x384xf32> to vector<2x256xf32>
    %73 = arith.addf %71, %72 : vector<2x256xf32>
    %74 = arith.negf %73 : vector<2x256xf32>
    %75 = math.exp %74 : vector<2x256xf32>
    %cst_36 = arith.constant 1.000000e+00 : f32
    %76 = vector.broadcast %cst_36 : f32 to vector<2x256xf32>
    %77 = arith.addf %76, %75 : vector<2x256xf32>
    %78 = arith.divf %76, %77 : vector<2x256xf32>
    %79 = vector.extract_strided_slice %78 {offsets = [0, 0], sizes = [2, 128], strides = [1, 1]} : vector<2x256xf32> to vector<2x128xf32>
    %80 = vector.extract_strided_slice %78 {offsets = [0, 128], sizes = [2, 128], strides = [1, 1]} : vector<2x256xf32> to vector<2x128xf32>
    %81 = vector.extract_strided_slice %13 {offsets = [0, 256], sizes = [2, 128], strides = [1, 1]} : vector<2x384xf32> to vector<2x128xf32>
    %82 = vector.extract_strided_slice %70 {offsets = [0, 256], sizes = [2, 128], strides = [1, 1]} : vector<2x384xf32> to vector<2x128xf32>
    %83 = arith.mulf %79, %82 : vector<2x128xf32>
    %84 = arith.addf %81, %83 : vector<2x128xf32>
    %85 = math.tanh %84 : vector<2x128xf32>
    %cst_37 = arith.constant 1.000000e+00 : f32
    %86 = vector.broadcast %cst_37 : f32 to vector<2x128xf32>
    %87 = arith.subf %86, %80 : vector<2x128xf32>
    %88 = arith.mulf %87, %85 : vector<2x128xf32>
    %89 = arith.mulf %80, %67 : vector<2x128xf32>
    %90 = arith.addf %88, %89 : vector<2x128xf32>
    %cst_38 = arith.constant dense<0.000000e+00> : vector<2x384xf32>
    %91 = tpu.matmul %90, %2, %cst_38 {dimension_numbers = #tpu.dot_dimension_numbers<[1], [0], [0], [1], [0, 0, 1, 1], [], []>} : vector<2x128xf32>, vector<128x384xf32>, vector<2x384xf32> -> vector<2x384xf32>
    %92 = vector.broadcast %3 : vector<1x384xf32> to vector<2x384xf32>
    %93 = arith.addf %91, %92 : vector<2x384xf32>
    %94 = vector.extract_strided_slice %18 {offsets = [0, 0], sizes = [2, 256], strides = [1, 1]} : vector<2x384xf32> to vector<2x256xf32>
    %95 = vector.extract_strided_slice %93 {offsets = [0, 0], sizes = [2, 256], strides = [1, 1]} : vector<2x384xf32> to vector<2x256xf32>
    %96 = arith.addf %94, %95 : vector<2x256xf32>
    %97 = arith.negf %96 : vector<2x256xf32>
    %98 = math.exp %97 : vector<2x256xf32>
    %cst_39 = arith.constant 1.000000e+00 : f32
    %99 = vector.broadcast %cst_39 : f32 to vector<2x256xf32>
    %100 = arith.addf %99, %98 : vector<2x256xf32>
    %101 = arith.divf %99, %100 : vector<2x256xf32>
    %102 = vector.extract_strided_slice %101 {offsets = [0, 0], sizes = [2, 128], strides = [1, 1]} : vector<2x256xf32> to vector<2x128xf32>
    %103 = vector.extract_strided_slice %101 {offsets = [0, 128], sizes = [2, 128], strides = [1, 1]} : vector<2x256xf32> to vector<2x128xf32>
    %104 = vector.extract_strided_slice %18 {offsets = [0, 256], sizes = [2, 128], strides = [1, 1]} : vector<2x384xf32> to vector<2x128xf32>
    %105 = vector.extract_strided_slice %93 {offsets = [0, 256], sizes = [2, 128], strides = [1, 1]} : vector<2x384xf32> to vector<2x128xf32>
    %106 = arith.mulf %102, %105 : vector<2x128xf32>
    %107 = arith.addf %104, %106 : vector<2x128xf32>
    %108 = math.tanh %107 : vector<2x128xf32>
    %cst_40 = arith.constant 1.000000e+00 : f32
    %109 = vector.broadcast %cst_40 : f32 to vector<2x128xf32>
    %110 = arith.subf %109, %103 : vector<2x128xf32>
    %111 = arith.mulf %110, %108 : vector<2x128xf32>
    %112 = arith.mulf %103, %90 : vector<2x128xf32>
    %113 = arith.addf %111, %112 : vector<2x128xf32>
    %cst_41 = arith.constant dense<0.000000e+00> : vector<2x384xf32>
    %114 = tpu.matmul %113, %2, %cst_41 {dimension_numbers = #tpu.dot_dimension_numbers<[1], [0], [0], [1], [0, 0, 1, 1], [], []>} : vector<2x128xf32>, vector<128x384xf32>, vector<2x384xf32> -> vector<2x384xf32>
    %115 = vector.broadcast %3 : vector<1x384xf32> to vector<2x384xf32>
    %116 = arith.addf %114, %115 : vector<2x384xf32>
    %117 = vector.extract_strided_slice %23 {offsets = [0, 0], sizes = [2, 256], strides = [1, 1]} : vector<2x384xf32> to vector<2x256xf32>
    %118 = vector.extract_strided_slice %116 {offsets = [0, 0], sizes = [2, 256], strides = [1, 1]} : vector<2x384xf32> to vector<2x256xf32>
    %119 = arith.addf %117, %118 : vector<2x256xf32>
    %120 = arith.negf %119 : vector<2x256xf32>
    %121 = math.exp %120 : vector<2x256xf32>
    %cst_42 = arith.constant 1.000000e+00 : f32
    %122 = vector.broadcast %cst_42 : f32 to vector<2x256xf32>
    %123 = arith.addf %122, %121 : vector<2x256xf32>
    %124 = arith.divf %122, %123 : vector<2x256xf32>
    %125 = vector.extract_strided_slice %124 {offsets = [0, 0], sizes = [2, 128], strides = [1, 1]} : vector<2x256xf32> to vector<2x128xf32>
    %126 = vector.extract_strided_slice %124 {offsets = [0, 128], sizes = [2, 128], strides = [1, 1]} : vector<2x256xf32> to vector<2x128xf32>
    %127 = vector.extract_strided_slice %23 {offsets = [0, 256], sizes = [2, 128], strides = [1, 1]} : vector<2x384xf32> to vector<2x128xf32>
    %128 = vector.extract_strided_slice %116 {offsets = [0, 256], sizes = [2, 128], strides = [1, 1]} : vector<2x384xf32> to vector<2x128xf32>
    %129 = arith.mulf %125, %128 : vector<2x128xf32>
    %130 = arith.addf %127, %129 : vector<2x128xf32>
    %131 = math.tanh %130 : vector<2x128xf32>
    %cst_43 = arith.constant 1.000000e+00 : f32
    %132 = vector.broadcast %cst_43 : f32 to vector<2x128xf32>
    %133 = arith.subf %132, %126 : vector<2x128xf32>
    %134 = arith.mulf %133, %131 : vector<2x128xf32>
    %135 = arith.mulf %126, %113 : vector<2x128xf32>
    %136 = arith.addf %134, %135 : vector<2x128xf32>
    %cst_44 = arith.constant dense<0.000000e+00> : vector<2x384xf32>
    %137 = tpu.matmul %136, %2, %cst_44 {dimension_numbers = #tpu.dot_dimension_numbers<[1], [0], [0], [1], [0, 0, 1, 1], [], []>} : vector<2x128xf32>, vector<128x384xf32>, vector<2x384xf32> -> vector<2x384xf32>
    %138 = vector.broadcast %3 : vector<1x384xf32> to vector<2x384xf32>
    %139 = arith.addf %137, %138 : vector<2x384xf32>
    %140 = vector.extract_strided_slice %28 {offsets = [0, 0], sizes = [2, 256], strides = [1, 1]} : vector<2x384xf32> to vector<2x256xf32>
    %141 = vector.extract_strided_slice %139 {offsets = [0, 0], sizes = [2, 256], strides = [1, 1]} : vector<2x384xf32> to vector<2x256xf32>
    %142 = arith.addf %140, %141 : vector<2x256xf32>
    %143 = arith.negf %142 : vector<2x256xf32>
    %144 = math.exp %143 : vector<2x256xf32>
    %cst_45 = arith.constant 1.000000e+00 : f32
    %145 = vector.broadcast %cst_45 : f32 to vector<2x256xf32>
    %146 = arith.addf %145, %144 : vector<2x256xf32>
    %147 = arith.divf %145, %146 : vector<2x256xf32>
    %148 = vector.extract_strided_slice %147 {offsets = [0, 0], sizes = [2, 128], strides = [1, 1]} : vector<2x256xf32> to vector<2x128xf32>
    %149 = vector.extract_strided_slice %147 {offsets = [0, 128], sizes = [2, 128], strides = [1, 1]} : vector<2x256xf32> to vector<2x128xf32>
    %150 = vector.extract_strided_slice %28 {offsets = [0, 256], sizes = [2, 128], strides = [1, 1]} : vector<2x384xf32> to vector<2x128xf32>
    %151 = vector.extract_strided_slice %139 {offsets = [0, 256], sizes = [2, 128], strides = [1, 1]} : vector<2x384xf32> to vector<2x128xf32>
    %152 = arith.mulf %148, %151 : vector<2x128xf32>
    %153 = arith.addf %150, %152 : vector<2x128xf32>
    %154 = math.tanh %153 : vector<2x128xf32>
    %cst_46 = arith.constant 1.000000e+00 : f32
    %155 = vector.broadcast %cst_46 : f32 to vector<2x128xf32>
    %156 = arith.subf %155, %149 : vector<2x128xf32>
    %157 = arith.mulf %156, %154 : vector<2x128xf32>
    %158 = arith.mulf %149, %136 : vector<2x128xf32>
    %159 = arith.addf %157, %158 : vector<2x128xf32>
    %cst_47 = arith.constant dense<0.000000e+00> : vector<2x384xf32>
    %160 = tpu.matmul %159, %2, %cst_47 {dimension_numbers = #tpu.dot_dimension_numbers<[1], [0], [0], [1], [0, 0, 1, 1], [], []>} : vector<2x128xf32>, vector<128x384xf32>, vector<2x384xf32> -> vector<2x384xf32>
    %161 = vector.broadcast %3 : vector<1x384xf32> to vector<2x384xf32>
    %162 = arith.addf %160, %161 : vector<2x384xf32>
    %163 = vector.extract_strided_slice %33 {offsets = [0, 0], sizes = [2, 256], strides = [1, 1]} : vector<2x384xf32> to vector<2x256xf32>
    %164 = vector.extract_strided_slice %162 {offsets = [0, 0], sizes = [2, 256], strides = [1, 1]} : vector<2x384xf32> to vector<2x256xf32>
    %165 = arith.addf %163, %164 : vector<2x256xf32>
    %166 = arith.negf %165 : vector<2x256xf32>
    %167 = math.exp %166 : vector<2x256xf32>
    %cst_48 = arith.constant 1.000000e+00 : f32
    %168 = vector.broadcast %cst_48 : f32 to vector<2x256xf32>
    %169 = arith.addf %168, %167 : vector<2x256xf32>
    %170 = arith.divf %168, %169 : vector<2x256xf32>
    %171 = vector.extract_strided_slice %170 {offsets = [0, 0], sizes = [2, 128], strides = [1, 1]} : vector<2x256xf32> to vector<2x128xf32>
    %172 = vector.extract_strided_slice %170 {offsets = [0, 128], sizes = [2, 128], strides = [1, 1]} : vector<2x256xf32> to vector<2x128xf32>
    %173 = vector.extract_strided_slice %33 {offsets = [0, 256], sizes = [2, 128], strides = [1, 1]} : vector<2x384xf32> to vector<2x128xf32>
    %174 = vector.extract_strided_slice %162 {offsets = [0, 256], sizes = [2, 128], strides = [1, 1]} : vector<2x384xf32> to vector<2x128xf32>
    %175 = arith.mulf %171, %174 : vector<2x128xf32>
    %176 = arith.addf %173, %175 : vector<2x128xf32>
    %177 = math.tanh %176 : vector<2x128xf32>
    %cst_49 = arith.constant 1.000000e+00 : f32
    %178 = vector.broadcast %cst_49 : f32 to vector<2x128xf32>
    %179 = arith.subf %178, %172 : vector<2x128xf32>
    %180 = arith.mulf %179, %177 : vector<2x128xf32>
    %181 = arith.mulf %172, %159 : vector<2x128xf32>
    %182 = arith.addf %180, %181 : vector<2x128xf32>
    %cst_50 = arith.constant dense<0.000000e+00> : vector<2x384xf32>
    %183 = tpu.matmul %182, %2, %cst_50 {dimension_numbers = #tpu.dot_dimension_numbers<[1], [0], [0], [1], [0, 0, 1, 1], [], []>} : vector<2x128xf32>, vector<128x384xf32>, vector<2x384xf32> -> vector<2x384xf32>
    %184 = vector.broadcast %3 : vector<1x384xf32> to vector<2x384xf32>
    %185 = arith.addf %183, %184 : vector<2x384xf32>
    %186 = vector.extract_strided_slice %38 {offsets = [0, 0], sizes = [2, 256], strides = [1, 1]} : vector<2x384xf32> to vector<2x256xf32>
    %187 = vector.extract_strided_slice %185 {offsets = [0, 0], sizes = [2, 256], strides = [1, 1]} : vector<2x384xf32> to vector<2x256xf32>
    %188 = arith.addf %186, %187 : vector<2x256xf32>
    %189 = arith.negf %188 : vector<2x256xf32>
    %190 = math.exp %189 : vector<2x256xf32>
    %cst_51 = arith.constant 1.000000e+00 : f32
    %191 = vector.broadcast %cst_51 : f32 to vector<2x256xf32>
    %192 = arith.addf %191, %190 : vector<2x256xf32>
    %193 = arith.divf %191, %192 : vector<2x256xf32>
    %194 = vector.extract_strided_slice %193 {offsets = [0, 0], sizes = [2, 128], strides = [1, 1]} : vector<2x256xf32> to vector<2x128xf32>
    %195 = vector.extract_strided_slice %193 {offsets = [0, 128], sizes = [2, 128], strides = [1, 1]} : vector<2x256xf32> to vector<2x128xf32>
    %196 = vector.extract_strided_slice %38 {offsets = [0, 256], sizes = [2, 128], strides = [1, 1]} : vector<2x384xf32> to vector<2x128xf32>
    %197 = vector.extract_strided_slice %185 {offsets = [0, 256], sizes = [2, 128], strides = [1, 1]} : vector<2x384xf32> to vector<2x128xf32>
    %198 = arith.mulf %194, %197 : vector<2x128xf32>
    %199 = arith.addf %196, %198 : vector<2x128xf32>
    %200 = math.tanh %199 : vector<2x128xf32>
    %cst_52 = arith.constant 1.000000e+00 : f32
    %201 = vector.broadcast %cst_52 : f32 to vector<2x128xf32>
    %202 = arith.subf %201, %195 : vector<2x128xf32>
    %203 = arith.mulf %202, %200 : vector<2x128xf32>
    %204 = arith.mulf %195, %182 : vector<2x128xf32>
    %205 = arith.addf %203, %204 : vector<2x128xf32>
    %cst_53 = arith.constant dense<0.000000e+00> : vector<2x384xf32>
    %206 = tpu.matmul %205, %2, %cst_53 {dimension_numbers = #tpu.dot_dimension_numbers<[1], [0], [0], [1], [0, 0, 1, 1], [], []>} : vector<2x128xf32>, vector<128x384xf32>, vector<2x384xf32> -> vector<2x384xf32>
    %207 = vector.broadcast %3 : vector<1x384xf32> to vector<2x384xf32>
    %208 = arith.addf %206, %207 : vector<2x384xf32>
    %209 = vector.extract_strided_slice %43 {offsets = [0, 0], sizes = [2, 256], strides = [1, 1]} : vector<2x384xf32> to vector<2x256xf32>
    %210 = vector.extract_strided_slice %208 {offsets = [0, 0], sizes = [2, 256], strides = [1, 1]} : vector<2x384xf32> to vector<2x256xf32>
    %211 = arith.addf %209, %210 : vector<2x256xf32>
    %212 = arith.negf %211 : vector<2x256xf32>
    %213 = math.exp %212 : vector<2x256xf32>
    %cst_54 = arith.constant 1.000000e+00 : f32
    %214 = vector.broadcast %cst_54 : f32 to vector<2x256xf32>
    %215 = arith.addf %214, %213 : vector<2x256xf32>
    %216 = arith.divf %214, %215 : vector<2x256xf32>
    %217 = vector.extract_strided_slice %216 {offsets = [0, 0], sizes = [2, 128], strides = [1, 1]} : vector<2x256xf32> to vector<2x128xf32>
    %218 = vector.extract_strided_slice %216 {offsets = [0, 128], sizes = [2, 128], strides = [1, 1]} : vector<2x256xf32> to vector<2x128xf32>
    %219 = vector.extract_strided_slice %43 {offsets = [0, 256], sizes = [2, 128], strides = [1, 1]} : vector<2x384xf32> to vector<2x128xf32>
    %220 = vector.extract_strided_slice %208 {offsets = [0, 256], sizes = [2, 128], strides = [1, 1]} : vector<2x384xf32> to vector<2x128xf32>
    %221 = arith.mulf %217, %220 : vector<2x128xf32>
    %222 = arith.addf %219, %221 : vector<2x128xf32>
    %223 = math.tanh %222 : vector<2x128xf32>
    %cst_55 = arith.constant 1.000000e+00 : f32
    %224 = vector.broadcast %cst_55 : f32 to vector<2x128xf32>
    %225 = arith.subf %224, %218 : vector<2x128xf32>
    %226 = arith.mulf %225, %223 : vector<2x128xf32>
    %227 = arith.mulf %218, %205 : vector<2x128xf32>
    %228 = arith.addf %226, %227 : vector<2x128xf32>
    %c0_56 = arith.constant 0 : index
    %c0_57 = arith.constant 0 : index
    %229 = vector.load %arg5[%c0_56, %c0_57] : memref<128x32xf32, #tpu.memory_space<vmem>>, vector<128x32xf32>
    %cst_58 = arith.constant dense<0.000000e+00> : vector<2x32xf32>
    %230 = tpu.matmul %228, %229, %cst_58 {dimension_numbers = #tpu.dot_dimension_numbers<[1], [0], [0], [1], [0, 0, 1, 1], [], []>} : vector<2x128xf32>, vector<128x32xf32>, vector<2x32xf32> -> vector<2x32xf32>
    %c0_59 = arith.constant 0 : index
    %c0_60 = arith.constant 0 : index
    %231 = vector.load %arg6[%c0_59, %c0_60] : memref<1x32xf32, #tpu.memory_space<vmem>>, vector<1x32xf32>
    %232 = vector.broadcast %231 : vector<1x32xf32> to vector<2x32xf32>
    %233 = arith.addf %230, %232 : vector<2x32xf32>
    %c0_61 = arith.constant 0 : index
    %c0_62 = arith.constant 0 : index
    %234 = vector.load %arg7[%c0_61, %c0_62] : memref<2x32xf32, #tpu.memory_space<vmem>>, vector<2x32xf32>
    tpu.vector_store %arg7[%c0_61, %c0_62], %233 {strides = array<i32>} : memref<2x32xf32, #tpu.memory_space<vmem>>, vector<2x32xf32>,
    return
  }
}

</mosaic_0001>

<llo_original>
// kernel: tpu_custom_call.1
$region0: #{tpu_custom_call.1}
  #allocation0 [shape = 'u32[]', space=smem, size = 0x4, offset = 0x4, fixed_abs, tag = 'smem constant byte address 0x4 - core index']
  #allocation1 [shape = 'u32[144,128]{1,0:T(1,128)}', space=vmem, size = 0x12000, scoped, tag = 'internal scratch']
  %s0 = inlined_call_operand.vmem [shape: f32[8,2,16], index: 0, kind: input, shape index: {}]
  %s1 = inlined_call_operand.vmem [shape: f32[16,384], index: 1, kind: input, shape index: {}]
  %s2 = inlined_call_operand.vmem [shape: f32[1,384], index: 2, kind: input, shape index: {}]
  %s3 = inlined_call_operand.hbm [shape: f32[128,384], index: 3, kind: input, shape index: {}]
  %s4 = inlined_call_operand.vmem [shape: f32[1,384], index: 4, kind: input, shape index: {}]
  %s5 = inlined_call_operand.vmem [shape: f32[128,32], index: 5, kind: input, shape index: {}]
  %s6 = inlined_call_operand.vmem [shape: f32[1,32], index: 6, kind: input, shape index: {}]
  %s7 = inlined_call_operand.hbm [shape: f32[2,32], index: 7, kind: output, shape index: {}]
  %s8 = sld [smem:[#allocation0]]
  $region42: #{tpu_custom_call.1} parent=0
    _
  %s10 = ssub.s32 1, %s8
  %s11 = scalar_select 0, %s10, %s8
  $region1: #{tpu_custom_call.1} parent=0
    #allocation2 [shape = 'u8[196608]{0}', space=vmem, size = 0x30000, scoped, tag = 'input window, operand 3, single buffered']
    #allocation3 [shape = 's32[1]{0}', space=sflag, size = 0x4, scoped, tag = 'scoped memory for tpu_custom_call.1']
    #allocation4 [shape = 's32[1]{0}', space=sflag, size = 0x4, scoped, tag = 'scoped memory for tpu_custom_call.1']
    #allocation5 [shape = 'u8[1024]{0}', space=vmem, size = 0x400, scoped, tag = 'output window, operand 0, single buffered']
    %12 = vsyncpa [#allocation3], 0
    %13 = vsyncpa [#allocation4], 0
    // Predicated region
    $region2: #{tpu_custom_call.1} parent=1 // pred_check
      _
    $region3: #{tpu_custom_call.1} parent=1 // pred_check_branch
      %15 = sbr.rel (0) target = $region5
    $region4: #{tpu_custom_call.1} parent=1 // pred_region
      _
    $region5: #{tpu_custom_call.1} parent=1 // pred_fallthru
      _
    // Predicated region
    $region6: #{tpu_custom_call.1} parent=1 // pred_check
      _
    $region7: #{tpu_custom_call.1} parent=1 // pred_check_branch
      %17 = sbr.rel (0) target = $region9
    $region8: #{tpu_custom_call.1} parent=1 // pred_region
      _
    $region9: #{tpu_custom_call.1} parent=1 // pred_fallthru
      _
    // Predicated region
    $region10: #{tpu_custom_call.1} parent=1 // pred_check
      _
    $region11: #{tpu_custom_call.1} parent=1 // pred_check_branch
      %19 = sbr.rel (0) target = $region13
    $region12: #{tpu_custom_call.1} parent=1 // pred_region
      _
    $region13: #{tpu_custom_call.1} parent=1 // pred_fallthru
      _
    // Predicated region
    $region14: #{tpu_custom_call.1} parent=1 // pred_check
      _
    $region15: #{tpu_custom_call.1} parent=1 // pred_check_branch
      %21 = sbr.rel (0) target = $region17
    $region16: #{tpu_custom_call.1} parent=1 // pred_region
      %s23 = ssub.s32 6144, 6144
      %24 = vsyncadd [#allocation3], %s23
      %s25 = sshll.u32 [#allocation2], 4
      %s26 = int_to_ptr.vmem [resolvable:$true] %s25
      %31 = dma.hbm_to_vmem [thread:$0]  %s3, 6144, %s26, [#allocation3], 384, 384, 24
    $region17: #{tpu_custom_call.1} parent=1 // pred_fallthru
      _
    // Predicated region
    $region18: #{tpu_custom_call.1} parent=1 // pred_check
      _
    $region19: #{tpu_custom_call.1} parent=1 // pred_check_branch
      %33 = sbr.rel (0) target = $region21
    $region20: #{tpu_custom_call.1} parent=1 // pred_region
      _
    $region21: #{tpu_custom_call.1} parent=1 // pred_fallthru
      _
    // Predicated region
    $region22: #{tpu_custom_call.1} parent=1 // pred_check
      _
    $region23: #{tpu_custom_call.1} parent=1 // pred_check_branch
      %35 = sbr.rel (0) target = $region25
    $region24: #{tpu_custom_call.1} parent=1 // pred_region
      _
    $region25: #{tpu_custom_call.1} parent=1 // pred_fallthru
      _
    // Predicated region
    $region26: #{tpu_custom_call.1} parent=1 // pred_check
      _
    $region27: #{tpu_custom_call.1} parent=1 // pred_check_branch
      %37 = sbr.rel (0) target = $region29
    $region28: #{tpu_custom_call.1} parent=1 // pred_region
      _
    $region29: #{tpu_custom_call.1} parent=1 // pred_fallthru
      _
    // Predicated region
    $region30: #{tpu_custom_call.1} parent=1 // pred_check
      _
    $region31: #{tpu_custom_call.1} parent=1 // pred_check_branch
      %39 = sbr.rel (0) target = $region33
    $region32: #{tpu_custom_call.1} parent=1 // pred_region
      %40 = dma.done [#allocation3], 6144
    $region33: #{tpu_custom_call.1} parent=1 // pred_fallthru
      _
    %v41 = vld [vmem:[%s1] sm:$0xff]
    %v42 = vld [vmem:[%s1 + $0x8] sm:$0xff]
    %v43 = vld [vmem:[%s1 + $0x10] sm:$0xff]
    %v44 = vld [vmem:[%s1 + $0x18] sm:$0xff]
    %v45 = vld [vmem:[%s1 + $0x20] sm:$0xff]
    %v46 = vld [vmem:[%s1 + $0x28] sm:$0xff]
    %v47 = vld [vmem:[%s2] sm:$0x7]
    %v48 = vld [vmem:[#allocation2] sm:$0xff]
    %v49 = vld [vmem:[#allocation2 + $0x8] sm:$0xff]
    %v50 = vld [vmem:[#allocation2 + $0x10] sm:$0xff]
    %v51 = vld [vmem:[#allocation2 + $0x18] sm:$0xff]
    %v52 = vld [vmem:[#allocation2 + $0x20] sm:$0xff]
    %v53 = vld [vmem:[#allocation2 + $0x28] sm:$0xff]
    %v54 = vld [vmem:[#allocation2 + $0x30] sm:$0xff]
    %v55 = vld [vmem:[#allocation2 + $0x38] sm:$0xff]
    %v56 = vld [vmem:[#allocation2 + $0x40] sm:$0xff]
    %v57 = vld [vmem:[#allocation2 + $0x48] sm:$0xff]
    %v58 = vld [vmem:[#allocation2 + $0x50] sm:$0xff]
    %v59 = vld [vmem:[#allocation2 + $0x58] sm:$0xff]
    %v60 = vld [vmem:[#allocation2 + $0x60] sm:$0xff]
    %v61 = vld [vmem:[#allocation2 + $0x68] sm:$0xff]
    %v62 = vld [vmem:[#allocation2 + $0x70] sm:$0xff]
    %v63 = vld [vmem:[#allocation2 + $0x78] sm:$0xff]
    %v64 = vld [vmem:[#allocation2 + $0x80] sm:$0xff]
    %v65 = vld [vmem:[#allocation2 + $0x88] sm:$0xff]
    %v66 = vld [vmem:[#allocation2 + $0x90] sm:$0xff]
    %v67 = vld [vmem:[#allocation2 + $0x98] sm:$0xff]
    %v68 = vld [vmem:[#allocation2 + $0xa0] sm:$0xff]
    %v69 = vld [vmem:[#allocation2 + $0xa8] sm:$0xff]
    %v70 = vld [vmem:[#allocation2 + $0xb0] sm:$0xff]
    %v71 = vld [vmem:[#allocation2 + $0xb8] sm:$0xff]
    %v72 = vld [vmem:[#allocation2 + $0xc0] sm:$0xff]
    %v73 = vld [vmem:[#allocation2 + $0xc8] sm:$0xff]
    %v74 = vld [vmem:[#allocation2 + $0xd0] sm:$0xff]
    %v75 = vld [vmem:[#allocation2 + $0xd8] sm:$0xff]
    %v76 = vld [vmem:[#allocation2 + $0xe0] sm:$0xff]
    %v77 = vld [vmem:[#allocation2 + $0xe8] sm:$0xff]
    %v78 = vld [vmem:[#allocation2 + $0xf0] sm:$0xff]
    %v79 = vld [vmem:[#allocation2 + $0xf8] sm:$0xff]
    %v80 = vld [vmem:[#allocation2 + $0x100] sm:$0xff]
    %v81 = vld [vmem:[#allocation2 + $0x108] sm:$0xff]
    %v82 = vld [vmem:[#allocation2 + $0x110] sm:$0xff]
    %v83 = vld [vmem:[#allocation2 + $0x118] sm:$0xff]
    %v84 = vld [vmem:[#allocation2 + $0x120] sm:$0xff]
    %v85 = vld [vmem:[#allocation2 + $0x128] sm:$0xff]
    %v86 = vld [vmem:[#allocation2 + $0x130] sm:$0xff]
    %v87 = vld [vmem:[#allocation2 + $0x138] sm:$0xff]
    %v88 = vld [vmem:[#allocation2 + $0x140] sm:$0xff]
    %v89 = vld [vmem:[#allocation2 + $0x148] sm:$0xff]
    %v90 = vld [vmem:[#allocation2 + $0x150] sm:$0xff]
    %v91 = vld [vmem:[#allocation2 + $0x158] sm:$0xff]
    %v92 = vld [vmem:[#allocation2 + $0x160] sm:$0xff]
    %v93 = vld [vmem:[#allocation2 + $0x168] sm:$0xff]
    %v94 = vld [vmem:[#allocation2 + $0x170] sm:$0xff]
    %v95 = vld [vmem:[#allocation2 + $0x178] sm:$0xff]
    %v96 = vld [vmem:[%s4] sm:$0x7]
    %v97 = vld [vmem:[%s0] sm:$0x3]
    %v99 = vlaneseq
    %v100 = vshrl.u32 %v99, 7
    %v101 = vsub.s32 0, %v100
    %v102 = vrot.slane %v47, %v101
    %v103 = vlaneseq
    %v104 = vshrl.u32 %v103, 7
    %v105 = vsub.s32 1, %v104
    %v106 = vrot.slane %v47, %v105
    %v107 = vlaneseq
    %v108 = vshrl.u32 %v107, 7
    %v109 = vsub.s32 2, %v108
    %v110 = vrot.slane %v47, %v109
    %vm114 = vcmask 130048
    %v116 = vsel %vm114, %v97, 0
    %118 = vmatprep.subr.mxu0 %v42
    %119 = vmatpush1.msra.mxu0 %v41
    %120 = vmatprep.subr.mxu0 %v45
    %121 = vmatpush1.msra.mxu0 %v44
    %122 = vmatprep.subr.mxu0 0.0
    %123 = vmatpush1.msra.mxu0 0.0
    %124 = vmatprep.subr.mxu0 0.0
    %125 = vmatpush1.msra.mxu0 0.0
    %126 = vmatprep.subr.mxu0 0.0
    %127 = vmatpush1.msra.mxu0 0.0
    %128 = vmatprep.subr.mxu0 0.0
    %129 = vmatpush1.msra.mxu0 0.0
    %130 = vmatprep.subr.mxu0 0.0
    %131 = vmatpush1.msra.mxu0 0.0
    %132 = vmatprep.subr.mxu0 0.0
    %133 = vmatpush1.msra.mxu0 0.0
    %134 = vmatprep.subr.mxu0 0.0
    %135 = vmatpush1.msra.mxu0 0.0
    %136 = vmatprep.subr.mxu0 0.0
    %137 = vmatpush1.msra.mxu0 0.0
    %138 = vmatprep.subr.mxu0 0.0
    %139 = vmatpush1.msra.mxu0 0.0
    %140 = vmatprep.subr.mxu0 0.0
    %141 = vmatpush1.msra.mxu0 0.0
    %142 = vmatprep.subr.mxu0 0.0
    %143 = vmatpush1.msra.mxu0 0.0
    %144 = vmatprep.subr.mxu0 0.0
    %145 = vmatpush1.msra.mxu0 0.0
    %146 = vmatprep.subr.mxu0 0.0
    %147 = vmatpush1.msra.mxu0 0.0
    %148 = vmatprep.subr.mxu0 0.0
    %149 = vmatpush1.msra.mxu0 0.0
    %150 = vmatprep.subr.mxu0 0.0
    %151 = vmatpush1.msra.mxu0 0.0
    %152 = vmatprep.subr.mxu0 0.0
    %153 = vmatpush1.msra.mxu0 0.0
    %154 = vmatprep.subr.mxu0 0.0
    %155 = vmatpush1.msra.mxu0 0.0
    %156 = vmatprep.subr.mxu0 0.0
    %157 = vmatpush1.msra.mxu0 0.0
    %158 = vmatprep.subr.mxu0 0.0
    %159 = vmatpush1.msra.mxu0 0.0
    %160 = vmatprep.subr.mxu0 0.0
    %161 = vmatpush1.msra.mxu0 0.0
    %162 = vmatprep.subr.mxu0 0.0
    %163 = vmatpush1.msra.mxu0 0.0
    %164 = vmatprep.subr.mxu0 0.0
    %165 = vmatpush1.msra.mxu0 0.0
    %166 = vmatprep.subr.mxu0 0.0
    %167 = vmatpush1.msra.mxu0 0.0
    %168 = vmatprep.subr.mxu0 0.0
    %169 = vmatpush1.msra.mxu0 0.0
    %170 = vmatprep.subr.mxu0 0.0
    %171 = vmatpush1.msra.mxu0 0.0
    %172 = vmatprep.subr.mxu0 0.0
    %173 = vmatpush1.msra.mxu0 0.0
    %174 = vmatprep.subr.mxu0 0.0
    %175 = vmatpush1.msra.mxu0 0.0
    %176 = vmatprep.subr.mxu0 0.0
    %177 = vmatpush1.msra.mxu0 0.0
    %178 = vmatprep.subr.mxu0 0.0
    %179 = vmatpush1.msra.mxu0 0.0
    %180 = vmatprep.subr.mxu0 0.0
    %181 = vmatpush1.msra.mxu0 0.0
    %182 = vmatprep.mubr.f32.mxu0 0.0
    %183 = vmatmul.mubr.f32.gmra.mrb[0].mxu0 %v116
    %v184 = vpop.f32.mrb[0].mxu0
    %v185 = vadd.f32 %v102, %v184
    %v186 = vpop.f32.mrb[0].mxu0
    %v187 = vadd.f32 %v106, %v186
    %188 = vdwg.mxu0
    %189 = vmatprep.subr.mxu0 0.0
    %190 = vmatpush1.msra.mxu0 %v43
    %191 = vmatprep.subr.mxu0 0.0
    %192 = vmatpush1.msra.mxu0 %v46
    %193 = vmatprep.subr.mxu0 0.0
    %194 = vmatpush1.msra.mxu0 0.0
    %195 = vmatprep.subr.mxu0 0.0
    %196 = vmatpush1.msra.mxu0 0.0
    %197 = vmatprep.subr.mxu0 0.0
    %198 = vmatpush1.msra.mxu0 0.0
    %199 = vmatprep.subr.mxu0 0.0
    %200 = vmatpush1.msra.mxu0 0.0
    %201 = vmatprep.subr.mxu0 0.0
    %202 = vmatpush1.msra.mxu0 0.0
    %203 = vmatprep.subr.mxu0 0.0
    %204 = vmatpush1.msra.mxu0 0.0
    %205 = vmatprep.subr.mxu0 0.0
    %206 = vmatpush1.msra.mxu0 0.0
    %207 = vmatprep.subr.mxu0 0.0
    %208 = vmatpush1.msra.mxu0 0.0
    %209 = vmatprep.subr.mxu0 0.0
    %210 = vmatpush1.msra.mxu0 0.0
    %211 = vmatprep.subr.mxu0 0.0
    %212 = vmatpush1.msra.mxu0 0.0
    %213 = vmatprep.subr.mxu0 0.0
    %214 = vmatpush1.msra.mxu0 0.0
    %215 = vmatprep.subr.mxu0 0.0
    %216 = vmatpush1.msra.mxu0 0.0
    %217 = vmatprep.subr.mxu0 0.0
    %218 = vmatpush1.msra.mxu0 0.0
    %219 = vmatprep.subr.mxu0 0.0
    %220 = vmatpush1.msra.mxu0 0.0
    %221 = vmatprep.subr.mxu0 0.0
    %222 = vmatpush1.msra.mxu0 0.0
    %223 = vmatprep.subr.mxu0 0.0
    %224 = vmatpush1.msra.mxu0 0.0
    %225 = vmatprep.subr.mxu0 0.0
    %226 = vmatpush1.msra.mxu0 0.0
    %227 = vmatprep.subr.mxu0 0.0
    %228 = vmatpush1.msra.mxu0 0.0
    %229 = vmatprep.subr.mxu0 0.0
    %230 = vmatpush1.msra.mxu0 0.0
    %231 = vmatprep.subr.mxu0 0.0
    %232 = vmatpush1.msra.mxu0 0.0
    %233 = vmatprep.subr.mxu0 0.0
    %234 = vmatpush1.msra.mxu0 0.0
    %235 = vmatprep.subr.mxu0 0.0
    %236 = vmatpush1.msra.mxu0 0.0
    %237 = vmatprep.subr.mxu0 0.0
    %238 = vmatpush1.msra.mxu0 0.0
    %239 = vmatprep.subr.mxu0 0.0
    %240 = vmatpush1.msra.mxu0 0.0
    %241 = vmatprep.subr.mxu0 0.0
    %242 = vmatpush1.msra.mxu0 0.0
    %243 = vmatprep.subr.mxu0 0.0
    %244 = vmatpush1.msra.mxu0 0.0
    %245 = vmatprep.subr.mxu0 0.0
    %246 = vmatpush1.msra.mxu0 0.0
    %247 = vmatprep.subr.mxu0 0.0
    %248 = vmatpush1.msra.mxu0 0.0
    %249 = vmatprep.subr.mxu0 0.0
    %250 = vmatpush1.msra.mxu0 0.0
    %251 = vmatprep.subr.mxu0 0.0
    %252 = vmatpush1.msra.mxu0 0.0
    %253 = vmatprep.mubr.f32.mxu0 0.0
    %254 = vmatmul.mubr.f32.gmra.mrb[0].mxu0 %v116
    %v255 = vpop.f32.mrb[0].mxu0
    %v256 = vadd.f32 %v110, %v255
    %v257 = vpop.f32.mrb[0].mxu0
    %258 = vdwg.mxu0
    %s259 = scalar_lea.vmem %s0, 2
    %v260 = vld [vmem:[%s259] sm:$0x3]
    %v262 = vsel %vm114, %v260, 0
    %264 = vmatprep.subr.mxu0 %v42
    %265 = vmatpush1.msra.mxu0 %v41
    %266 = vmatprep.subr.mxu0 %v45
    %267 = vmatpush1.msra.mxu0 %v44
    %268 = vmatprep.subr.mxu0 0.0
    %269 = vmatpush1.msra.mxu0 0.0
    %270 = vmatprep.subr.mxu0 0.0
    %271 = vmatpush1.msra.mxu0 0.0
    %272 = vmatprep.subr.mxu0 0.0
    %273 = vmatpush1.msra.mxu0 0.0
    %274 = vmatprep.subr.mxu0 0.0
    %275 = vmatpush1.msra.mxu0 0.0
    %276 = vmatprep.subr.mxu0 0.0
    %277 = vmatpush1.msra.mxu0 0.0
    %278 = vmatprep.subr.mxu0 0.0
    %279 = vmatpush1.msra.mxu0 0.0
    %280 = vmatprep.subr.mxu0 0.0
    %281 = vmatpush1.msra.mxu0 0.0
    %282 = vmatprep.subr.mxu0 0.0
    %283 = vmatpush1.msra.mxu0 0.0
    %284 = vmatprep.subr.mxu0 0.0
    %285 = vmatpush1.msra.mxu0 0.0
    %286 = vmatprep.subr.mxu0 0.0
    %287 = vmatpush1.msra.mxu0 0.0
    %288 = vmatprep.subr.mxu0 0.0
    %289 = vmatpush1.msra.mxu0 0.0
    %290 = vmatprep.subr.mxu0 0.0
    %291 = vmatpush1.msra.mxu0 0.0
    %292 = vmatprep.subr.mxu0 0.0
    %293 = vmatpush1.msra.mxu0 0.0
    %294 = vmatprep.subr.mxu0 0.0
    %295 = vmatpush1.msra.mxu0 0.0
    %296 = vmatprep.subr.mxu0 0.0
    %297 = vmatpush1.msra.mxu0 0.0
    %298 = vmatprep.subr.mxu0 0.0
    %299 = vmatpush1.msra.mxu0 0.0
    %300 = vmatprep.subr.mxu0 0.0
    %301 = vmatpush1.msra.mxu0 0.0
    %302 = vmatprep.subr.mxu0 0.0
    %303 = vmatpush1.msra.mxu0 0.0
    %304 = vmatprep.subr.mxu0 0.0
    %305 = vmatpush1.msra.mxu0 0.0
    %306 = vmatprep.subr.mxu0 0.0
    %307 = vmatpush1.msra.mxu0 0.0
    %308 = vmatprep.subr.mxu0 0.0
    %309 = vmatpush1.msra.mxu0 0.0
    %310 = vmatprep.subr.mxu0 0.0
    %311 = vmatpush1.msra.mxu0 0.0
    %312 = vmatprep.subr.mxu0 0.0
    %313 = vmatpush1.msra.mxu0 0.0
    %314 = vmatprep.subr.mxu0 0.0
    %315 = vmatpush1.msra.mxu0 0.0
    %316 = vmatprep.subr.mxu0 0.0
    %317 = vmatpush1.msra.mxu0 0.0
    %318 = vmatprep.subr.mxu0 0.0
    %319 = vmatpush1.msra.mxu0 0.0
    %320 = vmatprep.subr.mxu0 0.0
    %321 = vmatpush1.msra.mxu0 0.0
    %322 = vmatprep.subr.mxu0 0.0
    %323 = vmatpush1.msra.mxu0 0.0
    %324 = vmatprep.subr.mxu0 0.0
    %325 = vmatpush1.msra.mxu0 0.0
    %326 = vmatprep.subr.mxu0 0.0
    %327 = vmatpush1.msra.mxu0 0.0
    %328 = vmatprep.mubr.f32.mxu0 0.0
    %329 = vmatmul.mubr.f32.gmra.mrb[0].mxu0 %v262
    %v330 = vpop.f32.mrb[0].mxu0
    %v331 = vadd.f32 %v102, %v330
    %v332 = vpop.f32.mrb[0].mxu0
    %v333 = vadd.f32 %v106, %v332
    %334 = vdwg.mxu0
    %335 = vmatprep.subr.mxu0 0.0
    %336 = vmatpush1.msra.mxu0 %v43
    %337 = vmatprep.subr.mxu0 0.0
    %338 = vmatpush1.msra.mxu0 %v46
    %339 = vmatprep.subr.mxu0 0.0
    %340 = vmatpush1.msra.mxu0 0.0
    %341 = vmatprep.subr.mxu0 0.0
    %342 = vmatpush1.msra.mxu0 0.0
    %343 = vmatprep.subr.mxu0 0.0
    %344 = vmatpush1.msra.mxu0 0.0
    %345 = vmatprep.subr.mxu0 0.0
    %346 = vmatpush1.msra.mxu0 0.0
    %347 = vmatprep.subr.mxu0 0.0
    %348 = vmatpush1.msra.mxu0 0.0
    %349 = vmatprep.subr.mxu0 0.0
    %350 = vmatpush1.msra.mxu0 0.0
    %351 = vmatprep.subr.mxu0 0.0
    %352 = vmatpush1.msra.mxu0 0.0
    %353 = vmatprep.subr.mxu0 0.0
    %354 = vmatpush1.msra.mxu0 0.0
    %355 = vmatprep.subr.mxu0 0.0
    %356 = vmatpush1.msra.mxu0 0.0
    %357 = vmatprep.subr.mxu0 0.0
    %358 = vmatpush1.msra.mxu0 0.0
    %359 = vmatprep.subr.mxu0 0.0
    %360 = vmatpush1.msra.mxu0 0.0
    %361 = vmatprep.subr.mxu0 0.0
    %362 = vmatpush1.msra.mxu0 0.0
    %363 = vmatprep.subr.mxu0 0.0
    %364 = vmatpush1.msra.mxu0 0.0
    %365 = vmatprep.subr.mxu0 0.0
    %366 = vmatpush1.msra.mxu0 0.0
    %367 = vmatprep.subr.mxu0 0.0
    %368 = vmatpush1.msra.mxu0 0.0
    %369 = vmatprep.subr.mxu0 0.0
    %370 = vmatpush1.msra.mxu0 0.0
    %371 = vmatprep.subr.mxu0 0.0
    %372 = vmatpush1.msra.mxu0 0.0
    %373 = vmatprep.subr.mxu0 0.0
    %374 = vmatpush1.msra.mxu0 0.0
    %375 = vmatprep.subr.mxu0 0.0
    %376 = vmatpush1.msra.mxu0 0.0
    %377 = vmatprep.subr.mxu0 0.0
    %378 = vmatpush1.msra.mxu0 0.0
    %379 = vmatprep.subr.mxu0 0.0
    %380 = vmatpush1.msra.mxu0 0.0
    %381 = vmatprep.subr.mxu0 0.0
    %382 = vmatpush1.msra.mxu0 0.0
    %383 = vmatprep.subr.mxu0 0.0
    %384 = vmatpush1.msra.mxu0 0.0
    %385 = vmatprep.subr.mxu0 0.0
    %386 = vmatpush1.msra.mxu0 0.0
    %387 = vmatprep.subr.mxu0 0.0
    %388 = vmatpush1.msra.mxu0 0.0
    %389 = vmatprep.subr.mxu0 0.0
    %390 = vmatpush1.msra.mxu0 0.0
    %391 = vmatprep.subr.mxu0 0.0
    %392 = vmatpush1.msra.mxu0 0.0
    %393 = vmatprep.subr.mxu0 0.0
    %394 = vmatpush1.msra.mxu0 0.0
    %395 = vmatprep.subr.mxu0 0.0
    %396 = vmatpush1.msra.mxu0 0.0
    %397 = vmatprep.subr.mxu0 0.0
    %398 = vmatpush1.msra.mxu0 0.0
    %399 = vmatprep.mubr.f32.mxu0 0.0
    %400 = vmatmul.mubr.f32.gmra.mrb[0].mxu0 %v262
    %v401 = vpop.f32.mrb[0].mxu0
    %v402 = vadd.f32 %v110, %v401
    %v403 = vpop.f32.mrb[0].mxu0
    %404 = vdwg.mxu0
    %s405 = scalar_lea.vmem %s0, 4
    %v406 = vld [vmem:[%s405] sm:$0x3]
    %v408 = vsel %vm114, %v406, 0
    %410 = vmatprep.subr.mxu0 %v42
    %411 = vmatpush1.msra.mxu0 %v41
    %412 = vmatprep.subr.mxu0 %v45
    %413 = vmatpush1.msra.mxu0 %v44
    %414 = vmatprep.subr.mxu0 0.0
    %415 = vmatpush1.msra.mxu0 0.0
    %416 = vmatprep.subr.mxu0 0.0
    %417 = vmatpush1.msra.mxu0 0.0
    %418 = vmatprep.subr.mxu0 0.0
    %419 = vmatpush1.msra.mxu0 0.0
    %420 = vmatprep.subr.mxu0 0.0
    %421 = vmatpush1.msra.mxu0 0.0
    %422 = vmatprep.subr.mxu0 0.0
    %423 = vmatpush1.msra.mxu0 0.0
    %424 = vmatprep.subr.mxu0 0.0
    %425 = vmatpush1.msra.mxu0 0.0
    %426 = vmatprep.subr.mxu0 0.0
    %427 = vmatpush1.msra.mxu0 0.0
    %428 = vmatprep.subr.mxu0 0.0
    %429 = vmatpush1.msra.mxu0 0.0
    %430 = vmatprep.subr.mxu0 0.0
    %431 = vmatpush1.msra.mxu0 0.0
    %432 = vmatprep.subr.mxu0 0.0
    %433 = vmatpush1.msra.mxu0 0.0
    %434 = vmatprep.subr.mxu0 0.0
    %435 = vmatpush1.msra.mxu0 0.0
    %436 = vmatprep.subr.mxu0 0.0
    %437 = vmatpush1.msra.mxu0 0.0
    %438 = vmatprep.subr.mxu0 0.0
    %439 = vmatpush1.msra.mxu0 0.0
    %440 = vmatprep.subr.mxu0 0.0
    %441 = vmatpush1.msra.mxu0 0.0
    %442 = vmatprep.subr.mxu0 0.0
    %443 = vmatpush1.msra.mxu0 0.0
    %444 = vmatprep.subr.mxu0 0.0
    %445 = vmatpush1.msra.mxu0 0.0
    %446 = vmatprep.subr.mxu0 0.0
    %447 = vmatpush1.msra.mxu0 0.0
    %448 = vmatprep.subr.mxu0 0.0
    %449 = vmatpush1.msra.mxu0 0.0
    %450 = vmatprep.subr.mxu0 0.0
    %451 = vmatpush1.msra.mxu0 0.0
    %452 = vmatprep.subr.mxu0 0.0
    %453 = vmatpush1.msra.mxu0 0.0
    %454 = vmatprep.subr.mxu0 0.0
    %455 = vmatpush1.msra.mxu0 0.0
    %456 = vmatprep.subr.mxu0 0.0
    %457 = vmatpush1.msra.mxu0 0.0
    %458 = vmatprep.subr.mxu0 0.0
    %459 = vmatpush1.msra.mxu0 0.0
    %460 = vmatprep.subr.mxu0 0.0
    %461 = vmatpush1.msra.mxu0 0.0
    %462 = vmatprep.subr.mxu0 0.0
    %463 = vmatpush1.msra.mxu0 0.0
    %464 = vmatprep.subr.mxu0 0.0
    %465 = vmatpush1.msra.mxu0 0.0
    %466 = vmatprep.subr.mxu0 0.0
    %467 = vmatpush1.msra.mxu0 0.0
    %468 = vmatprep.subr.mxu0 0.0
    %469 = vmatpush1.msra.mxu0 0.0
    %470 = vmatprep.subr.mxu0 0.0
    %471 = vmatpush1.msra.mxu0 0.0
    %472 = vmatprep.subr.mxu0 0.0
    %473 = vmatpush1.msra.mxu0 0.0
    %474 = vmatprep.mubr.f32.mxu0 0.0
    %475 = vmatmul.mubr.f32.gmra.mrb[0].mxu0 %v408
    %v476 = vpop.f32.mrb[0].mxu0
    %v477 = vadd.f32 %v102, %v476
    %v478 = vpop.f32.mrb[0].mxu0
    %v479 = vadd.f32 %v106, %v478
    %480 = vdwg.mxu0
    %481 = vmatprep.subr.mxu0 0.0
    %482 = vmatpush1.msra.mxu0 %v43
    %483 = vmatprep.subr.mxu0 0.0
    %484 = vmatpush1.msra.mxu0 %v46
    %485 = vmatprep.subr.mxu0 0.0
    %486 = vmatpush1.msra.mxu0 0.0
    %487 = vmatprep.subr.mxu0 0.0
    %488 = vmatpush1.msra.mxu0 0.0
    %489 = vmatprep.subr.mxu0 0.0
    %490 = vmatpush1.msra.mxu0 0.0
    %491 = vmatprep.subr.mxu0 0.0
    %492 = vmatpush1.msra.mxu0 0.0
    %493 = vmatprep.subr.mxu0 0.0
    %494 = vmatpush1.msra.mxu0 0.0
    %495 = vmatprep.subr.mxu0 0.0
    %496 = vmatpush1.msra.mxu0 0.0
    %497 = vmatprep.subr.mxu0 0.0
    %498 = vmatpush1.msra.mxu0 0.0
    %499 = vmatprep.subr.mxu0 0.0
    %500 = vmatpush1.msra.mxu0 0.0
    %501 = vmatprep.subr.mxu0 0.0
    %502 = vmatpush1.msra.mxu0 0.0
    %503 = vmatprep.subr.mxu0 0.0
    %504 = vmatpush1.msra.mxu0 0.0
    %505 = vmatprep.subr.mxu0 0.0
    %506 = vmatpush1.msra.mxu0 0.0
    %507 = vmatprep.subr.mxu0 0.0
    %508 = vmatpush1.msra.mxu0 0.0
    %509 = vmatprep.subr.mxu0 0.0
    %510 = vmatpush1.msra.mxu0 0.0
    %511 = vmatprep.subr.mxu0 0.0
    %512 = vmatpush1.msra.mxu0 0.0
    %513 = vmatprep.subr.mxu0 0.0
    %514 = vmatpush1.msra.mxu0 0.0
    %515 = vmatprep.subr.mxu0 0.0
    %516 = vmatpush1.msra.mxu0 0.0
    %517 = vmatprep.subr.mxu0 0.0
    %518 = vmatpush1.msra.mxu0 0.0
    %519 = vmatprep.subr.mxu0 0.0
    %520 = vmatpush1.msra.mxu0 0.0
    %521 = vmatprep.subr.mxu0 0.0
    %522 = vmatpush1.msra.mxu0 0.0
    %523 = vmatprep.subr.mxu0 0.0
    %524 = vmatpush1.msra.mxu0 0.0
    %525 = vmatprep.subr.mxu0 0.0
    %526 = vmatpush1.msra.mxu0 0.0
    %527 = vmatprep.subr.mxu0 0.0
    %528 = vmatpush1.msra.mxu0 0.0
    %529 = vmatprep.subr.mxu0 0.0
    %530 = vmatpush1.msra.mxu0 0.0
    %531 = vmatprep.subr.mxu0 0.0
    %532 = vmatpush1.msra.mxu0 0.0
    %533 = vmatprep.subr.mxu0 0.0
    %534 = vmatpush1.msra.mxu0 0.0
    %535 = vmatprep.subr.mxu0 0.0
    %536 = vmatpush1.msra.mxu0 0.0
    %537 = vmatprep.subr.mxu0 0.0
    %538 = vmatpush1.msra.mxu0 0.0
    %539 = vmatprep.subr.mxu0 0.0
    %540 = vmatpush1.msra.mxu0 0.0
    %541 = vmatprep.subr.mxu0 0.0
    %542 = vmatpush1.msra.mxu0 0.0
    %543 = vmatprep.subr.mxu0 0.0
    %544 = vmatpush1.msra.mxu0 0.0
    %545 = vmatprep.mubr.f32.mxu0 0.0
    %546 = vmatmul.mubr.f32.gmra.mrb[0].mxu0 %v408
    %v547 = vpop.f32.mrb[0].mxu0
    %v548 = vadd.f32 %v110, %v547
    %v549 = vpop.f32.mrb[0].mxu0
    %550 = vdwg.mxu0
    %s551 = scalar_lea.vmem %s0, 6
    %v552 = vld [vmem:[%s551] sm:$0x3]
    %v554 = vsel %vm114, %v552, 0
    %556 = vmatprep.subr.mxu0 %v42
    %557 = vmatpush1.msra.mxu0 %v41
    %558 = vmatprep.subr.mxu0 %v45
    %559 = vmatpush1.msra.mxu0 %v44
    %560 = vmatprep.subr.mxu0 0.0
    %561 = vmatpush1.msra.mxu0 0.0
    %562 = vmatprep.subr.mxu0 0.0
    %563 = vmatpush1.msra.mxu0 0.0
    %564 = vmatprep.subr.mxu0 0.0
    %565 = vmatpush1.msra.mxu0 0.0
    %566 = vmatprep.subr.mxu0 0.0
    %567 = vmatpush1.msra.mxu0 0.0
    %568 = vmatprep.subr.mxu0 0.0
    %569 = vmatpush1.msra.mxu0 0.0
    %570 = vmatprep.subr.mxu0 0.0
    %571 = vmatpush1.msra.mxu0 0.0
    %572 = vmatprep.subr.mxu0 0.0
    %573 = vmatpush1.msra.mxu0 0.0
    %574 = vmatprep.subr.mxu0 0.0
    %575 = vmatpush1.msra.mxu0 0.0
    %576 = vmatprep.subr.mxu0 0.0
    %577 = vmatpush1.msra.mxu0 0.0
    %578 = vmatprep.subr.mxu0 0.0
    %579 = vmatpush1.msra.mxu0 0.0
    %580 = vmatprep.subr.mxu0 0.0
    %581 = vmatpush1.msra.mxu0 0.0
    %582 = vmatprep.subr.mxu0 0.0
    %583 = vmatpush1.msra.mxu0 0.0
    %584 = vmatprep.subr.mxu0 0.0
    %585 = vmatpush1.msra.mxu0 0.0
    %586 = vmatprep.subr.mxu0 0.0
    %587 = vmatpush1.msra.mxu0 0.0
    %588 = vmatprep.subr.mxu0 0.0
    %589 = vmatpush1.msra.mxu0 0.0
    %590 = vmatprep.subr.mxu0 0.0
    %591 = vmatpush1.msra.mxu0 0.0
    %592 = vmatprep.subr.mxu0 0.0
    %593 = vmatpush1.msra.mxu0 0.0
    %594 = vmatprep.subr.mxu0 0.0
    %595 = vmatpush1.msra.mxu0 0.0
    %596 = vmatprep.subr.mxu0 0.0
    %597 = vmatpush1.msra.mxu0 0.0
    %598 = vmatprep.subr.mxu0 0.0
    %599 = vmatpush1.msra.mxu0 0.0
    %600 = vmatprep.subr.mxu0 0.0
    %601 = vmatpush1.msra.mxu0 0.0
    %602 = vmatprep.subr.mxu0 0.0
    %603 = vmatpush1.msra.mxu0 0.0
    %604 = vmatprep.subr.mxu0 0.0
    %605 = vmatpush1.msra.mxu0 0.0
    %606 = vmatprep.subr.mxu0 0.0
    %607 = vmatpush1.msra.mxu0 0.0
    %608 = vmatprep.subr.mxu0 0.0
    %609 = vmatpush1.msra.mxu0 0.0
    %610 = vmatprep.subr.mxu0 0.0
    %611 = vmatpush1.msra.mxu0 0.0
    %612 = vmatprep.subr.mxu0 0.0
    %613 = vmatpush1.msra.mxu0 0.0
    %614 = vmatprep.subr.mxu0 0.0
    %615 = vmatpush1.msra.mxu0 0.0
    %616 = vmatprep.subr.mxu0 0.0
    %617 = vmatpush1.msra.mxu0 0.0
    %618 = vmatprep.subr.mxu0 0.0
    %619 = vmatpush1.msra.mxu0 0.0
    %620 = vmatprep.mubr.f32.mxu0 0.0
    %621 = vmatmul.mubr.f32.gmra.mrb[0].mxu0 %v554
    %v622 = vpop.f32.mrb[0].mxu0
    %v623 = vadd.f32 %v102, %v622
    %v624 = vpop.f32.mrb[0].mxu0
    %v625 = vadd.f32 %v106, %v624
    %626 = vdwg.mxu0
    %627 = vmatprep.subr.mxu0 0.0
    %628 = vmatpush1.msra.mxu0 %v43
    %629 = vmatprep.subr.mxu0 0.0
    %630 = vmatpush1.msra.mxu0 %v46
    %631 = vmatprep.subr.mxu0 0.0
    %632 = vmatpush1.msra.mxu0 0.0
    %633 = vmatprep.subr.mxu0 0.0
    %634 = vmatpush1.msra.mxu0 0.0
    %635 = vmatprep.subr.mxu0 0.0
    %636 = vmatpush1.msra.mxu0 0.0
    %637 = vmatprep.subr.mxu0 0.0
    %638 = vmatpush1.msra.mxu0 0.0
    %639 = vmatprep.subr.mxu0 0.0
    %640 = vmatpush1.msra.mxu0 0.0
    %641 = vmatprep.subr.mxu0 0.0
    %642 = vmatpush1.msra.mxu0 0.0
    %643 = vmatprep.subr.mxu0 0.0
    %644 = vmatpush1.msra.mxu0 0.0
    %645 = vmatprep.subr.mxu0 0.0
    %646 = vmatpush1.msra.mxu0 0.0
    %647 = vmatprep.subr.mxu0 0.0
    %648 = vmatpush1.msra.mxu0 0.0
    %649 = vmatprep.subr.mxu0 0.0
    %650 = vmatpush1.msra.mxu0 0.0
    %651 = vmatprep.subr.mxu0 0.0
    %652 = vmatpush1.msra.mxu0 0.0
    %653 = vmatprep.subr.mxu0 0.0
    %654 = vmatpush1.msra.mxu0 0.0
    %655 = vmatprep.subr.mxu0 0.0
    %656 = vmatpush1.msra.mxu0 0.0
    %657 = vmatprep.subr.mxu0 0.0
    %658 = vmatpush1.msra.mxu0 0.0
    %659 = vmatprep.subr.mxu0 0.0
    %660 = vmatpush1.msra.mxu0 0.0
    %661 = vmatprep.subr.mxu0 0.0
    %662 = vmatpush1.msra.mxu0 0.0
    %663 = vmatprep.subr.mxu0 0.0
    %664 = vmatpush1.msra.mxu0 0.0
    %665 = vmatprep.subr.mxu0 0.0
    %666 = vmatpush1.msra.mxu0 0.0
    %667 = vmatprep.subr.mxu0 0.0
    %668 = vmatpush1.msra.mxu0 0.0
    %669 = vmatprep.subr.mxu0 0.0
    %670 = vmatpush1.msra.mxu0 0.0
    %671 = vmatprep.subr.mxu0 0.0
    %672 = vmatpush1.msra.mxu0 0.0
    %673 = vmatprep.subr.mxu0 0.0
    %674 = vmatpush1.msra.mxu0 0.0
    %675 = vmatprep.subr.mxu0 0.0
    %676 = vmatpush1.msra.mxu0 0.0
    %677 = vmatprep.subr.mxu0 0.0
    %678 = vmatpush1.msra.mxu0 0.0
    %679 = vmatprep.subr.mxu0 0.0
    %680 = vmatpush1.msra.mxu0 0.0
    %681 = vmatprep.subr.mxu0 0.0
    %682 = vmatpush1.msra.mxu0 0.0
    %683 = vmatprep.subr.mxu0 0.0
    %684 = vmatpush1.msra.mxu0 0.0
    %685 = vmatprep.subr.mxu0 0.0
    %686 = vmatpush1.msra.mxu0 0.0
    %687 = vmatprep.subr.mxu0 0.0
    %688 = vmatpush1.msra.mxu0 0.0
    %689 = vmatprep.subr.mxu0 0.0
    %690 = vmatpush1.msra.mxu0 0.0
    %691 = vmatprep.mubr.f32.mxu0 0.0
    %692 = vmatmul.mubr.f32.gmra.mrb[0].mxu0 %v554
    %v693 = vpop.f32.mrb[0].mxu0
    %v694 = vadd.f32 %v110, %v693
    %v695 = vpop.f32.mrb[0].mxu0
    %696 = vdwg.mxu0
    %s697 = scalar_lea.vmem %s0, 8
    %v698 = vld [vmem:[%s697] sm:$0x3]
    %v700 = vsel %vm114, %v698, 0
    %702 = vmatprep.subr.mxu0 %v42
    %703 = vmatpush1.msra.mxu0 %v41
    %704 = vmatprep.subr.mxu0 %v45
    %705 = vmatpush1.msra.mxu0 %v44
    %706 = vmatprep.subr.mxu0 0.0
    %707 = vmatpush1.msra.mxu0 0.0
    %708 = vmatprep.subr.mxu0 0.0
    %709 = vmatpush1.msra.mxu0 0.0
    %710 = vmatprep.subr.mxu0 0.0
    %711 = vmatpush1.msra.mxu0 0.0
    %712 = vmatprep.subr.mxu0 0.0
    %713 = vmatpush1.msra.mxu0 0.0
    %714 = vmatprep.subr.mxu0 0.0
    %715 = vmatpush1.msra.mxu0 0.0
    %716 = vmatprep.subr.mxu0 0.0
    %717 = vmatpush1.msra.mxu0 0.0
    %718 = vmatprep.subr.mxu0 0.0
    %719 = vmatpush1.msra.mxu0 0.0
    %720 = vmatprep.subr.mxu0 0.0
    %721 = vmatpush1.msra.mxu0 0.0
    %722 = vmatprep.subr.mxu0 0.0
    %723 = vmatpush1.msra.mxu0 0.0
    %724 = vmatprep.subr.mxu0 0.0
    %725 = vmatpush1.msra.mxu0 0.0
    %726 = vmatprep.subr.mxu0 0.0
    %727 = vmatpush1.msra.mxu0 0.0
    %728 = vmatprep.subr.mxu0 0.0
    %729 = vmatpush1.msra.mxu0 0.0
    %730 = vmatprep.subr.mxu0 0.0
    %731 = vmatpush1.msra.mxu0 0.0
    %732 = vmatprep.subr.mxu0 0.0
    %733 = vmatpush1.msra.mxu0 0.0
    %734 = vmatprep.subr.mxu0 0.0
    %735 = vmatpush1.msra.mxu0 0.0
    %736 = vmatprep.subr.mxu0 0.0
    %737 = vmatpush1.msra.mxu0 0.0
    %738 = vmatprep.subr.mxu0 0.0
    %739 = vmatpush1.msra.mxu0 0.0
    %740 = vmatprep.subr.mxu0 0.0
    %741 = vmatpush1.msra.mxu0 0.0
    %742 = vmatprep.subr.mxu0 0.0
    %743 = vmatpush1.msra.mxu0 0.0
    %744 = vmatprep.subr.mxu0 0.0
    %745 = vmatpush1.msra.mxu0 0.0
    %746 = vmatprep.subr.mxu0 0.0
    %747 = vmatpush1.msra.mxu0 0.0
    %748 = vmatprep.subr.mxu0 0.0
    %749 = vmatpush1.msra.mxu0 0.0
    %750 = vmatprep.subr.mxu0 0.0
    %751 = vmatpush1.msra.mxu0 0.0
    %752 = vmatprep.subr.mxu0 0.0
    %753 = vmatpush1.msra.mxu0 0.0
    %754 = vmatprep.subr.mxu0 0.0
    %755 = vmatpush1.msra.mxu0 0.0
    %756 = vmatprep.subr.mxu0 0.0
    %757 = vmatpush1.msra.mxu0 0.0
    %758 = vmatprep.subr.mxu0 0.0
    %759 = vmatpush1.msra.mxu0 0.0
    %760 = vmatprep.subr.mxu0 0.0
    %761 = vmatpush1.msra.mxu0 0.0
    %762 = vmatprep.subr.mxu0 0.0
    %763 = vmatpush1.msra.mxu0 0.0
    %764 = vmatprep.subr.mxu0 0.0
    %765 = vmatpush1.msra.mxu0 0.0
    %766 = vmatprep.mubr.f32.mxu0 0.0
    %767 = vmatmul.mubr.f32.gmra.mrb[0].mxu0 %v700
    %v768 = vpop.f32.mrb[0].mxu0
    %v769 = vadd.f32 %v102, %v768
    %v770 = vpop.f32.mrb[0].mxu0
    %v771 = vadd.f32 %v106, %v770
    %772 = vdwg.mxu0
    %773 = vmatprep.subr.mxu0 0.0
    %774 = vmatpush1.msra.mxu0 %v43
    %775 = vmatprep.subr.mxu0 0.0
    %776 = vmatpush1.msra.mxu0 %v46
    %777 = vmatprep.subr.mxu0 0.0
    %778 = vmatpush1.msra.mxu0 0.0
    %779 = vmatprep.subr.mxu0 0.0
    %780 = vmatpush1.msra.mxu0 0.0
    %781 = vmatprep.subr.mxu0 0.0
    %782 = vmatpush1.msra.mxu0 0.0
    %783 = vmatprep.subr.mxu0 0.0
    %784 = vmatpush1.msra.mxu0 0.0
    %785 = vmatprep.subr.mxu0 0.0
    %786 = vmatpush1.msra.mxu0 0.0
    %787 = vmatprep.subr.mxu0 0.0
    %788 = vmatpush1.msra.mxu0 0.0
    %789 = vmatprep.subr.mxu0 0.0
    %790 = vmatpush1.msra.mxu0 0.0
    %791 = vmatprep.subr.mxu0 0.0
    %792 = vmatpush1.msra.mxu0 0.0
    %793 = vmatprep.subr.mxu0 0.0
    %794 = vmatpush1.msra.mxu0 0.0
    %795 = vmatprep.subr.mxu0 0.0
    %796 = vmatpush1.msra.mxu0 0.0
    %797 = vmatprep.subr.mxu0 0.0
    %798 = vmatpush1.msra.mxu0 0.0
    %799 = vmatprep.subr.mxu0 0.0
    %800 = vmatpush1.msra.mxu0 0.0
    %801 = vmatprep.subr.mxu0 0.0
    %802 = vmatpush1.msra.mxu0 0.0
    %803 = vmatprep.subr.mxu0 0.0
    %804 = vmatpush1.msra.mxu0 0.0
    %805 = vmatprep.subr.mxu0 0.0
    %806 = vmatpush1.msra.mxu0 0.0
    %807 = vmatprep.subr.mxu0 0.0
    %808 = vmatpush1.msra.mxu0 0.0
    %809 = vmatprep.subr.mxu0 0.0
    %810 = vmatpush1.msra.mxu0 0.0
    %811 = vmatprep.subr.mxu0 0.0
    %812 = vmatpush1.msra.mxu0 0.0
    %813 = vmatprep.subr.mxu0 0.0
    %814 = vmatpush1.msra.mxu0 0.0
    %815 = vmatprep.subr.mxu0 0.0
    %816 = vmatpush1.msra.mxu0 0.0
    %817 = vmatprep.subr.mxu0 0.0
    %818 = vmatpush1.msra.mxu0 0.0
    %819 = vmatprep.subr.mxu0 0.0
    %820 = vmatpush1.msra.mxu0 0.0
    %821 = vmatprep.subr.mxu0 0.0
    %822 = vmatpush1.msra.mxu0 0.0
    %823 = vmatprep.subr.mxu0 0.0
    %824 = vmatpush1.msra.mxu0 0.0
    %825 = vmatprep.subr.mxu0 0.0
    %826 = vmatpush1.msra.mxu0 0.0
    %827 = vmatprep.subr.mxu0 0.0
    %828 = vmatpush1.msra.mxu0 0.0
    %829 = vmatprep.subr.mxu0 0.0
    %830 = vmatpush1.msra.mxu0 0.0
    %831 = vmatprep.subr.mxu0 0.0
    %832 = vmatpush1.msra.mxu0 0.0
    %833 = vmatprep.subr.mxu0 0.0
    %834 = vmatpush1.msra.mxu0 0.0
    %835 = vmatprep.subr.mxu0 0.0
    %836 = vmatpush1.msra.mxu0 0.0
    %837 = vmatprep.mubr.f32.mxu0 0.0
    %838 = vmatmul.mubr.f32.gmra.mrb[0].mxu0 %v700
    %v839 = vpop.f32.mrb[0].mxu0
    %v840 = vadd.f32 %v110, %v839
    %v841 = vpop.f32.mrb[0].mxu0
    %842 = vdwg.mxu0
    %s843 = scalar_lea.vmem %s0, 10
    %v844 = vld [vmem:[%s843] sm:$0x3]
    %v846 = vsel %vm114, %v844, 0
    %848 = vmatprep.subr.mxu0 %v42
    %849 = vmatpush1.msra.mxu0 %v41
    %850 = vmatprep.subr.mxu0 %v45
    %851 = vmatpush1.msra.mxu0 %v44
    %852 = vmatprep.subr.mxu0 0.0
    %853 = vmatpush1.msra.mxu0 0.0
    %854 = vmatprep.subr.mxu0 0.0
    %855 = vmatpush1.msra.mxu0 0.0
    %856 = vmatprep.subr.mxu0 0.0
    %857 = vmatpush1.msra.mxu0 0.0
    %858 = vmatprep.subr.mxu0 0.0
    %859 = vmatpush1.msra.mxu0 0.0
    %860 = vmatprep.subr.mxu0 0.0
    %861 = vmatpush1.msra.mxu0 0.0
    %862 = vmatprep.subr.mxu0 0.0
    %863 = vmatpush1.msra.mxu0 0.0
    %864 = vmatprep.subr.mxu0 0.0
    %865 = vmatpush1.msra.mxu0 0.0
    %866 = vmatprep.subr.mxu0 0.0
    %867 = vmatpush1.msra.mxu0 0.0
    %868 = vmatprep.subr.mxu0 0.0
    %869 = vmatpush1.msra.mxu0 0.0
    %870 = vmatprep.subr.mxu0 0.0
    %871 = vmatpush1.msra.mxu0 0.0
    %872 = vmatprep.subr.mxu0 0.0
    %873 = vmatpush1.msra.mxu0 0.0
    %874 = vmatprep.subr.mxu0 0.0
    %875 = vmatpush1.msra.mxu0 0.0
    %876 = vmatprep.subr.mxu0 0.0
    %877 = vmatpush1.msra.mxu0 0.0
    %878 = vmatprep.subr.mxu0 0.0
    %879 = vmatpush1.msra.mxu0 0.0
    %880 = vmatprep.subr.mxu0 0.0
    %881 = vmatpush1.msra.mxu0 0.0
    %882 = vmatprep.subr.mxu0 0.0
    %883 = vmatpush1.msra.mxu0 0.0
    %884 = vmatprep.subr.mxu0 0.0
    %885 = vmatpush1.msra.mxu0 0.0
    %886 = vmatprep.subr.mxu0 0.0
    %887 = vmatpush1.msra.mxu0 0.0
    %888 = vmatprep.subr.mxu0 0.0
    %889 = vmatpush1.msra.mxu0 0.0
    %890 = vmatprep.subr.mxu0 0.0
    %891 = vmatpush1.msra.mxu0 0.0
    %892 = vmatprep.subr.mxu0 0.0
    %893 = vmatpush1.msra.mxu0 0.0
    %894 = vmatprep.subr.mxu0 0.0
    %895 = vmatpush1.msra.mxu0 0.0
    %896 = vmatprep.subr.mxu0 0.0
    %897 = vmatpush1.msra.mxu0 0.0
    %898 = vmatprep.subr.mxu0 0.0
    %899 = vmatpush1.msra.mxu0 0.0
    %900 = vmatprep.subr.mxu0 0.0
    %901 = vmatpush1.msra.mxu0 0.0
    %902 = vmatprep.subr.mxu0 0.0
    %903 = vmatpush1.msra.mxu0 0.0
    %904 = vmatprep.subr.mxu0 0.0
    %905 = vmatpush1.msra.mxu0 0.0
    %906 = vmatprep.subr.mxu0 0.0
    %907 = vmatpush1.msra.mxu0 0.0
    %908 = vmatprep.subr.mxu0 0.0
    %909 = vmatpush1.msra.mxu0 0.0
    %910 = vmatprep.subr.mxu0 0.0
    %911 = vmatpush1.msra.mxu0 0.0
    %912 = vmatprep.mubr.f32.mxu0 0.0
    %913 = vmatmul.mubr.f32.gmra.mrb[0].mxu0 %v846
    %v914 = vpop.f32.mrb[0].mxu0
    %v915 = vadd.f32 %v102, %v914
    %v916 = vpop.f32.mrb[0].mxu0
    %v917 = vadd.f32 %v106, %v916
    %918 = vdwg.mxu0
    %919 = vmatprep.subr.mxu0 0.0
    %920 = vmatpush1.msra.mxu0 %v43
    %921 = vmatprep.subr.mxu0 0.0
    %922 = vmatpush1.msra.mxu0 %v46
    %923 = vmatprep.subr.mxu0 0.0
    %924 = vmatpush1.msra.mxu0 0.0
    %925 = vmatprep.subr.mxu0 0.0
    %926 = vmatpush1.msra.mxu0 0.0
    %927 = vmatprep.subr.mxu0 0.0
    %928 = vmatpush1.msra.mxu0 0.0
    %929 = vmatprep.subr.mxu0 0.0
    %930 = vmatpush1.msra.mxu0 0.0
    %931 = vmatprep.subr.mxu0 0.0
    %932 = vmatpush1.msra.mxu0 0.0
    %933 = vmatprep.subr.mxu0 0.0
    %934 = vmatpush1.msra.mxu0 0.0
    %935 = vmatprep.subr.mxu0 0.0
    %936 = vmatpush1.msra.mxu0 0.0
    %937 = vmatprep.subr.mxu0 0.0
    %938 = vmatpush1.msra.mxu0 0.0
    %939 = vmatprep.subr.mxu0 0.0
    %940 = vmatpush1.msra.mxu0 0.0
    %941 = vmatprep.subr.mxu0 0.0
    %942 = vmatpush1.msra.mxu0 0.0
    %943 = vmatprep.subr.mxu0 0.0
    %944 = vmatpush1.msra.mxu0 0.0
    %945 = vmatprep.subr.mxu0 0.0
    %946 = vmatpush1.msra.mxu0 0.0
    %947 = vmatprep.subr.mxu0 0.0
    %948 = vmatpush1.msra.mxu0 0.0
    %949 = vmatprep.subr.mxu0 0.0
    %950 = vmatpush1.msra.mxu0 0.0
    %951 = vmatprep.subr.mxu0 0.0
    %952 = vmatpush1.msra.mxu0 0.0
    %953 = vmatprep.subr.mxu0 0.0
    %954 = vmatpush1.msra.mxu0 0.0
    %955 = vmatprep.subr.mxu0 0.0
    %956 = vmatpush1.msra.mxu0 0.0
    %957 = vmatprep.subr.mxu0 0.0
    %958 = vmatpush1.msra.mxu0 0.0
    %959 = vmatprep.subr.mxu0 0.0
    %960 = vmatpush1.msra.mxu0 0.0
    %961 = vmatprep.subr.mxu0 0.0
    %962 = vmatpush1.msra.mxu0 0.0
    %963 = vmatprep.subr.mxu0 0.0
    %964 = vmatpush1.msra.mxu0 0.0
    %965 = vmatprep.subr.mxu0 0.0
    %966 = vmatpush1.msra.mxu0 0.0
    %967 = vmatprep.subr.mxu0 0.0
    %968 = vmatpush1.msra.mxu0 0.0
    %969 = vmatprep.subr.mxu0 0.0
    %970 = vmatpush1.msra.mxu0 0.0
    %971 = vmatprep.subr.mxu0 0.0
    %972 = vmatpush1.msra.mxu0 0.0
    %973 = vmatprep.subr.mxu0 0.0
    %974 = vmatpush1.msra.mxu0 0.0
    %975 = vmatprep.subr.mxu0 0.0
    %976 = vmatpush1.msra.mxu0 0.0
    %977 = vmatprep.subr.mxu0 0.0
    %978 = vmatpush1.msra.mxu0 0.0
    %979 = vmatprep.subr.mxu0 0.0
    %980 = vmatpush1.msra.mxu0 0.0
    %981 = vmatprep.subr.mxu0 0.0
    %982 = vmatpush1.msra.mxu0 0.0
    %983 = vmatprep.mubr.f32.mxu0 0.0
    %984 = vmatmul.mubr.f32.gmra.mrb[0].mxu0 %v846
    %v985 = vpop.f32.mrb[0].mxu0
    %v986 = vadd.f32 %v110, %v985
    %v987 = vpop.f32.mrb[0].mxu0
    %988 = vdwg.mxu0
    %s989 = scalar_lea.vmem %s0, 12
    %v990 = vld [vmem:[%s989] sm:$0x3]
    %v992 = vsel %vm114, %v990, 0
    %994 = vmatprep.subr.mxu0 %v42
    %995 = vmatpush1.msra.mxu0 %v41
    %996 = vmatprep.subr.mxu0 %v45
    %997 = vmatpush1.msra.mxu0 %v44
    %998 = vmatprep.subr.mxu0 0.0
    %999 = vmatpush1.msra.mxu0 0.0
    %1000 = vmatprep.subr.mxu0 0.0
    %1001 = vmatpush1.msra.mxu0 0.0
    %1002 = vmatprep.subr.mxu0 0.0
    %1003 = vmatpush1.msra.mxu0 0.0
    %1004 = vmatprep.subr.mxu0 0.0
    %1005 = vmatpush1.msra.mxu0 0.0
    %1006 = vmatprep.subr.mxu0 0.0
    %1007 = vmatpush1.msra.mxu0 0.0
    %1008 = vmatprep.subr.mxu0 0.0
    %1009 = vmatpush1.msra.mxu0 0.0
    %1010 = vmatprep.subr.mxu0 0.0
    %1011 = vmatpush1.msra.mxu0 0.0
    %1012 = vmatprep.subr.mxu0 0.0
    %1013 = vmatpush1.msra.mxu0 0.0
    %1014 = vmatprep.subr.mxu0 0.0
    %1015 = vmatpush1.msra.mxu0 0.0
    %1016 = vmatprep.subr.mxu0 0.0
    %1017 = vmatpush1.msra.mxu0 0.0
    %1018 = vmatprep.subr.mxu0 0.0
    %1019 = vmatpush1.msra.mxu0 0.0
    %1020 = vmatprep.subr.mxu0 0.0
    %1021 = vmatpush1.msra.mxu0 0.0
    %1022 = vmatprep.subr.mxu0 0.0
    %1023 = vmatpush1.msra.mxu0 0.0
    %1024 = vmatprep.subr.mxu0 0.0
    %1025 = vmatpush1.msra.mxu0 0.0
    %1026 = vmatprep.subr.mxu0 0.0
    %1027 = vmatpush1.msra.mxu0 0.0
    %1028 = vmatprep.subr.mxu0 0.0
    %1029 = vmatpush1.msra.mxu0 0.0
    %1030 = vmatprep.subr.mxu0 0.0
    %1031 = vmatpush1.msra.mxu0 0.0
    %1032 = vmatprep.subr.mxu0 0.0
    %1033 = vmatpush1.msra.mxu0 0.0
    %1034 = vmatprep.subr.mxu0 0.0
    %1035 = vmatpush1.msra.mxu0 0.0
    %1036 = vmatprep.subr.mxu0 0.0
    %1037 = vmatpush1.msra.mxu0 0.0
    %1038 = vmatprep.subr.mxu0 0.0
    %1039 = vmatpush1.msra.mxu0 0.0
    %1040 = vmatprep.subr.mxu0 0.0
    %1041 = vmatpush1.msra.mxu0 0.0
    %1042 = vmatprep.subr.mxu0 0.0
    %1043 = vmatpush1.msra.mxu0 0.0
    %1044 = vmatprep.subr.mxu0 0.0
    %1045 = vmatpush1.msra.mxu0 0.0
    %1046 = vmatprep.subr.mxu0 0.0
    %1047 = vmatpush1.msra.mxu0 0.0
    %1048 = vmatprep.subr.mxu0 0.0
    %1049 = vmatpush1.msra.mxu0 0.0
    %1050 = vmatprep.subr.mxu0 0.0
    %1051 = vmatpush1.msra.mxu0 0.0
    %1052 = vmatprep.subr.mxu0 0.0
    %1053 = vmatpush1.msra.mxu0 0.0
    %1054 = vmatprep.subr.mxu0 0.0
    %1055 = vmatpush1.msra.mxu0 0.0
    %1056 = vmatprep.subr.mxu0 0.0
    %1057 = vmatpush1.msra.mxu0 0.0
    %1058 = vmatprep.mubr.f32.mxu0 0.0
    %1059 = vmatmul.mubr.f32.gmra.mrb[0].mxu0 %v992
    %v1060 = vpop.f32.mrb[0].mxu0
    %v1061 = vadd.f32 %v102, %v1060
    %v1062 = vpop.f32.mrb[0].mxu0
    %v1063 = vadd.f32 %v106, %v1062
    %1064 = vdwg.mxu0
    %1065 = vmatprep.subr.mxu0 0.0
    %1066 = vmatpush1.msra.mxu0 %v43
    %1067 = vmatprep.subr.mxu0 0.0
    %1068 = vmatpush1.msra.mxu0 %v46
    %1069 = vmatprep.subr.mxu0 0.0
    %1070 = vmatpush1.msra.mxu0 0.0
    %1071 = vmatprep.subr.mxu0 0.0
    %1072 = vmatpush1.msra.mxu0 0.0
    %1073 = vmatprep.subr.mxu0 0.0
    %1074 = vmatpush1.msra.mxu0 0.0
    %1075 = vmatprep.subr.mxu0 0.0
    %1076 = vmatpush1.msra.mxu0 0.0
    %1077 = vmatprep.subr.mxu0 0.0
    %1078 = vmatpush1.msra.mxu0 0.0
    %1079 = vmatprep.subr.mxu0 0.0
    %1080 = vmatpush1.msra.mxu0 0.0
    %1081 = vmatprep.subr.mxu0 0.0
    %1082 = vmatpush1.msra.mxu0 0.0
    %1083 = vmatprep.subr.mxu0 0.0
    %1084 = vmatpush1.msra.mxu0 0.0
    %1085 = vmatprep.subr.mxu0 0.0
    %1086 = vmatpush1.msra.mxu0 0.0
    %1087 = vmatprep.subr.mxu0 0.0
    %1088 = vmatpush1.msra.mxu0 0.0
    %1089 = vmatprep.subr.mxu0 0.0
    %1090 = vmatpush1.msra.mxu0 0.0
    %1091 = vmatprep.subr.mxu0 0.0
    %1092 = vmatpush1.msra.mxu0 0.0
    %1093 = vmatprep.subr.mxu0 0.0
    %1094 = vmatpush1.msra.mxu0 0.0
    %1095 = vmatprep.subr.mxu0 0.0
    %1096 = vmatpush1.msra.mxu0 0.0
    %1097 = vmatprep.subr.mxu0 0.0
    %1098 = vmatpush1.msra.mxu0 0.0
    %1099 = vmatprep.subr.mxu0 0.0
    %1100 = vmatpush1.msra.mxu0 0.0
    %1101 = vmatprep.subr.mxu0 0.0
    %1102 = vmatpush1.msra.mxu0 0.0
    %1103 = vmatprep.subr.mxu0 0.0
    %1104 = vmatpush1.msra.mxu0 0.0
    %1105 = vmatprep.subr.mxu0 0.0
    %1106 = vmatpush1.msra.mxu0 0.0
    %1107 = vmatprep.subr.mxu0 0.0
    %1108 = vmatpush1.msra.mxu0 0.0
    %1109 = vmatprep.subr.mxu0 0.0
    %1110 = vmatpush1.msra.mxu0 0.0
    %1111 = vmatprep.subr.mxu0 0.0
    %1112 = vmatpush1.msra.mxu0 0.0
    %1113 = vmatprep.subr.mxu0 0.0
    %1114 = vmatpush1.msra.mxu0 0.0
    %1115 = vmatprep.subr.mxu0 0.0
    %1116 = vmatpush1.msra.mxu0 0.0
    %1117 = vmatprep.subr.mxu0 0.0
    %1118 = vmatpush1.msra.mxu0 0.0
    %1119 = vmatprep.subr.mxu0 0.0
    %1120 = vmatpush1.msra.mxu0 0.0
    %1121 = vmatprep.subr.mxu0 0.0
    %1122 = vmatpush1.msra.mxu0 0.0
    %1123 = vmatprep.subr.mxu0 0.0
    %1124 = vmatpush1.msra.mxu0 0.0
    %1125 = vmatprep.subr.mxu0 0.0
    %1126 = vmatpush1.msra.mxu0 0.0
    %1127 = vmatprep.subr.mxu0 0.0
    %1128 = vmatpush1.msra.mxu0 0.0
    %1129 = vmatprep.mubr.f32.mxu0 0.0
    %1130 = vmatmul.mubr.f32.gmra.mrb[0].mxu0 %v992
    %v1131 = vpop.f32.mrb[0].mxu0
    %v1132 = vadd.f32 %v110, %v1131
    %v1133 = vpop.f32.mrb[0].mxu0
    %1134 = vdwg.mxu0
    %s1135 = scalar_lea.vmem %s0, 14
    %v1136 = vld [vmem:[%s1135] sm:$0x3]
    %v1138 = vsel %vm114, %v1136, 0
    %1140 = vmatprep.subr.mxu0 %v42
    %1141 = vmatpush1.msra.mxu0 %v41
    %1142 = vmatprep.subr.mxu0 %v45
    %1143 = vmatpush1.msra.mxu0 %v44
    %1144 = vmatprep.subr.mxu0 0.0
    %1145 = vmatpush1.msra.mxu0 0.0
    %1146 = vmatprep.subr.mxu0 0.0
    %1147 = vmatpush1.msra.mxu0 0.0
    %1148 = vmatprep.subr.mxu0 0.0
    %1149 = vmatpush1.msra.mxu0 0.0
    %1150 = vmatprep.subr.mxu0 0.0
    %1151 = vmatpush1.msra.mxu0 0.0
    %1152 = vmatprep.subr.mxu0 0.0
    %1153 = vmatpush1.msra.mxu0 0.0
    %1154 = vmatprep.subr.mxu0 0.0
    %1155 = vmatpush1.msra.mxu0 0.0
    %1156 = vmatprep.subr.mxu0 0.0
    %1157 = vmatpush1.msra.mxu0 0.0
    %1158 = vmatprep.subr.mxu0 0.0
    %1159 = vmatpush1.msra.mxu0 0.0
    %1160 = vmatprep.subr.mxu0 0.0
    %1161 = vmatpush1.msra.mxu0 0.0
    %1162 = vmatprep.subr.mxu0 0.0
    %1163 = vmatpush1.msra.mxu0 0.0
    %1164 = vmatprep.subr.mxu0 0.0
    %1165 = vmatpush1.msra.mxu0 0.0
    %1166 = vmatprep.subr.mxu0 0.0
    %1167 = vmatpush1.msra.mxu0 0.0
    %1168 = vmatprep.subr.mxu0 0.0
    %1169 = vmatpush1.msra.mxu0 0.0
    %1170 = vmatprep.subr.mxu0 0.0
    %1171 = vmatpush1.msra.mxu0 0.0
    %1172 = vmatprep.subr.mxu0 0.0
    %1173 = vmatpush1.msra.mxu0 0.0
    %1174 = vmatprep.subr.mxu0 0.0
    %1175 = vmatpush1.msra.mxu0 0.0
    %1176 = vmatprep.subr.mxu0 0.0
    %1177 = vmatpush1.msra.mxu0 0.0
    %1178 = vmatprep.subr.mxu0 0.0
    %1179 = vmatpush1.msra.mxu0 0.0
    %1180 = vmatprep.subr.mxu0 0.0
    %1181 = vmatpush1.msra.mxu0 0.0
    %1182 = vmatprep.subr.mxu0 0.0
    %1183 = vmatpush1.msra.mxu0 0.0
    %1184 = vmatprep.subr.mxu0 0.0
    %1185 = vmatpush1.msra.mxu0 0.0
    %1186 = vmatprep.subr.mxu0 0.0
    %1187 = vmatpush1.msra.mxu0 0.0
    %1188 = vmatprep.subr.mxu0 0.0
    %1189 = vmatpush1.msra.mxu0 0.0
    %1190 = vmatprep.subr.mxu0 0.0
    %1191 = vmatpush1.msra.mxu0 0.0
    %1192 = vmatprep.subr.mxu0 0.0
    %1193 = vmatpush1.msra.mxu0 0.0
    %1194 = vmatprep.subr.mxu0 0.0
    %1195 = vmatpush1.msra.mxu0 0.0
    %1196 = vmatprep.subr.mxu0 0.0
    %1197 = vmatpush1.msra.mxu0 0.0
    %1198 = vmatprep.subr.mxu0 0.0
    %1199 = vmatpush1.msra.mxu0 0.0
    %1200 = vmatprep.subr.mxu0 0.0
    %1201 = vmatpush1.msra.mxu0 0.0
    %1202 = vmatprep.subr.mxu0 0.0
    %1203 = vmatpush1.msra.mxu0 0.0
    %1204 = vmatprep.mubr.f32.mxu0 0.0
    %1205 = vmatmul.mubr.f32.gmra.mrb[0].mxu0 %v1138
    %v1206 = vpop.f32.mrb[0].mxu0
    %v1207 = vadd.f32 %v102, %v1206
    %v1208 = vpop.f32.mrb[0].mxu0
    %v1209 = vadd.f32 %v106, %v1208
    %1210 = vdwg.mxu0
    %1211 = vmatprep.subr.mxu0 0.0
    %1212 = vmatpush1.msra.mxu0 %v43
    %1213 = vmatprep.subr.mxu0 0.0
    %1214 = vmatpush1.msra.mxu0 %v46
    %1215 = vmatprep.subr.mxu0 0.0
    %1216 = vmatpush1.msra.mxu0 0.0
    %1217 = vmatprep.subr.mxu0 0.0
    %1218 = vmatpush1.msra.mxu0 0.0
    %1219 = vmatprep.subr.mxu0 0.0
    %1220 = vmatpush1.msra.mxu0 0.0
    %1221 = vmatprep.subr.mxu0 0.0
    %1222 = vmatpush1.msra.mxu0 0.0
    %1223 = vmatprep.subr.mxu0 0.0
    %1224 = vmatpush1.msra.mxu0 0.0
    %1225 = vmatprep.subr.mxu0 0.0
    %1226 = vmatpush1.msra.mxu0 0.0
    %1227 = vmatprep.subr.mxu0 0.0
    %1228 = vmatpush1.msra.mxu0 0.0
    %1229 = vmatprep.subr.mxu0 0.0
    %1230 = vmatpush1.msra.mxu0 0.0
    %1231 = vmatprep.subr.mxu0 0.0
    %1232 = vmatpush1.msra.mxu0 0.0
    %1233 = vmatprep.subr.mxu0 0.0
    %1234 = vmatpush1.msra.mxu0 0.0
    %1235 = vmatprep.subr.mxu0 0.0
    %1236 = vmatpush1.msra.mxu0 0.0
    %1237 = vmatprep.subr.mxu0 0.0
    %1238 = vmatpush1.msra.mxu0 0.0
    %1239 = vmatprep.subr.mxu0 0.0
    %1240 = vmatpush1.msra.mxu0 0.0
    %1241 = vmatprep.subr.mxu0 0.0
    %1242 = vmatpush1.msra.mxu0 0.0
    %1243 = vmatprep.subr.mxu0 0.0
    %1244 = vmatpush1.msra.mxu0 0.0
    %1245 = vmatprep.subr.mxu0 0.0
    %1246 = vmatpush1.msra.mxu0 0.0
    %1247 = vmatprep.subr.mxu0 0.0
    %1248 = vmatpush1.msra.mxu0 0.0
    %1249 = vmatprep.subr.mxu0 0.0
    %1250 = vmatpush1.msra.mxu0 0.0
    %1251 = vmatprep.subr.mxu0 0.0
    %1252 = vmatpush1.msra.mxu0 0.0
    %1253 = vmatprep.subr.mxu0 0.0
    %1254 = vmatpush1.msra.mxu0 0.0
    %1255 = vmatprep.subr.mxu0 0.0
    %1256 = vmatpush1.msra.mxu0 0.0
    %1257 = vmatprep.subr.mxu0 0.0
    %1258 = vmatpush1.msra.mxu0 0.0
    %1259 = vmatprep.subr.mxu0 0.0
    %1260 = vmatpush1.msra.mxu0 0.0
    %1261 = vmatprep.subr.mxu0 0.0
    %1262 = vmatpush1.msra.mxu0 0.0
    %1263 = vmatprep.subr.mxu0 0.0
    %1264 = vmatpush1.msra.mxu0 0.0
    %1265 = vmatprep.subr.mxu0 0.0
    %1266 = vmatpush1.msra.mxu0 0.0
    %1267 = vmatprep.subr.mxu0 0.0
    %1268 = vmatpush1.msra.mxu0 0.0
    %1269 = vmatprep.subr.mxu0 0.0
    %1270 = vmatpush1.msra.mxu0 0.0
    %1271 = vmatprep.subr.mxu0 0.0
    %1272 = vmatpush1.msra.mxu0 0.0
    %1273 = vmatprep.subr.mxu0 0.0
    %1274 = vmatpush1.msra.mxu0 0.0
    %1275 = vmatprep.mubr.f32.mxu0 0.0
    %1276 = vmatmul.mubr.f32.gmra.mrb[0].mxu0 %v1138
    %v1277 = vpop.f32.mrb[0].mxu0
    %v1278 = vadd.f32 %v110, %v1277
    %v1279 = vpop.f32.mrb[0].mxu0
    %1280 = vdwg.mxu0
    %v1282 = vlaneseq
    %v1283 = vshrl.u32 %v1282, 7
    %v1284 = vsub.s32 0, %v1283
    %v1285 = vrot.slane %v96, %v1284
    %v1286 = vlaneseq
    %v1287 = vshrl.u32 %v1286, 7
    %v1288 = vsub.s32 1, %v1287
    %v1289 = vrot.slane %v96, %v1288
    %v1290 = vlaneseq
    %v1291 = vshrl.u32 %v1290, 7
    %v1292 = vsub.s32 2, %v1291
    %v1293 = vrot.slane %v96, %v1292
    %1297 = vmatprep.subr.mxu0 %v49
    %1298 = vmatpush1.msra.mxu0 %v48
    %1299 = vmatprep.subr.mxu0 %v52
    %1300 = vmatpush1.msra.mxu0 %v51
    %1301 = vmatprep.subr.mxu0 %v55
    %1302 = vmatpush1.msra.mxu0 %v54
    %1303 = vmatprep.subr.mxu0 %v58
    %1304 = vmatpush1.msra.mxu0 %v57
    %1305 = vmatprep.subr.mxu0 %v61
    %1306 = vmatpush1.msra.mxu0 %v60
    %1307 = vmatprep.subr.mxu0 %v64
    %1308 = vmatpush1.msra.mxu0 %v63
    %1309 = vmatprep.subr.mxu0 %v67
    %1310 = vmatpush1.msra.mxu0 %v66
    %1311 = vmatprep.subr.mxu0 %v70
    %1312 = vmatpush1.msra.mxu0 %v69
    %1313 = vmatprep.subr.mxu0 %v73
    %1314 = vmatpush1.msra.mxu0 %v72
    %1315 = vmatprep.subr.mxu0 %v76
    %1316 = vmatpush1.msra.mxu0 %v75
    %1317 = vmatprep.subr.mxu0 %v79
    %1318 = vmatpush1.msra.mxu0 %v78
    %1319 = vmatprep.subr.mxu0 %v82
    %1320 = vmatpush1.msra.mxu0 %v81
    %1321 = vmatprep.subr.mxu0 %v85
    %1322 = vmatpush1.msra.mxu0 %v84
    %1323 = vmatprep.subr.mxu0 %v88
    %1324 = vmatpush1.msra.mxu0 %v87
    %1325 = vmatprep.subr.mxu0 %v91
    %1326 = vmatpush1.msra.mxu0 %v90
    %1327 = vmatprep.subr.mxu0 %v94
    %1328 = vmatpush1.msra.mxu0 %v93
    %1329 = vmatprep.subr.mxu0 0.0
    %1330 = vmatpush1.msra.mxu0 0.0
    %1331 = vmatprep.subr.mxu0 0.0
    %1332 = vmatpush1.msra.mxu0 0.0
    %1333 = vmatprep.subr.mxu0 0.0
    %1334 = vmatpush1.msra.mxu0 0.0
    %1335 = vmatprep.subr.mxu0 0.0
    %1336 = vmatpush1.msra.mxu0 0.0
    %1337 = vmatprep.subr.mxu0 0.0
    %1338 = vmatpush1.msra.mxu0 0.0
    %1339 = vmatprep.subr.mxu0 0.0
    %1340 = vmatpush1.msra.mxu0 0.0
    %1341 = vmatprep.subr.mxu0 0.0
    %1342 = vmatpush1.msra.mxu0 0.0
    %1343 = vmatprep.subr.mxu0 0.0
    %1344 = vmatpush1.msra.mxu0 0.0
    %1345 = vmatprep.subr.mxu0 0.0
    %1346 = vmatpush1.msra.mxu0 0.0
    %1347 = vmatprep.subr.mxu0 0.0
    %1348 = vmatpush1.msra.mxu0 0.0
    %1349 = vmatprep.subr.mxu0 0.0
    %1350 = vmatpush1.msra.mxu0 0.0
    %1351 = vmatprep.subr.mxu0 0.0
    %1352 = vmatpush1.msra.mxu0 0.0
    %1353 = vmatprep.subr.mxu0 0.0
    %1354 = vmatpush1.msra.mxu0 0.0
    %1355 = vmatprep.subr.mxu0 0.0
    %1356 = vmatpush1.msra.mxu0 0.0
    %1357 = vmatprep.subr.mxu0 0.0
    %1358 = vmatpush1.msra.mxu0 0.0
    %1359 = vmatprep.subr.mxu0 0.0
    %1360 = vmatpush1.msra.mxu0 0.0
    %1361 = vmatprep.mubr.f32.mxu0 0.0
    %1362 = vmatmul.mubr.f32.gmra.mrb[0].mxu0 0.0
    %v1363 = vpop.f32.mrb[0].mxu0
    %v1364 = vadd.f32 %v1285, %v1363
    %v1365 = vpop.f32.mrb[0].mxu0
    %v1366 = vadd.f32 %v1289, %v1365
    %1367 = vdwg.mxu0
    %1368 = vmatprep.subr.mxu0 0.0
    %1369 = vmatpush1.msra.mxu0 %v50
    %1370 = vmatprep.subr.mxu0 0.0
    %1371 = vmatpush1.msra.mxu0 %v53
    %1372 = vmatprep.subr.mxu0 0.0
    %1373 = vmatpush1.msra.mxu0 %v56
    %1374 = vmatprep.subr.mxu0 0.0
    %1375 = vmatpush1.msra.mxu0 %v59
    %1376 = vmatprep.subr.mxu0 0.0
    %1377 = vmatpush1.msra.mxu0 %v62
    %1378 = vmatprep.subr.mxu0 0.0
    %1379 = vmatpush1.msra.mxu0 %v65
    %1380 = vmatprep.subr.mxu0 0.0
    %1381 = vmatpush1.msra.mxu0 %v68
    %1382 = vmatprep.subr.mxu0 0.0
    %1383 = vmatpush1.msra.mxu0 %v71
    %1384 = vmatprep.subr.mxu0 0.0
    %1385 = vmatpush1.msra.mxu0 %v74
    %1386 = vmatprep.subr.mxu0 0.0
    %1387 = vmatpush1.msra.mxu0 %v77
    %1388 = vmatprep.subr.mxu0 0.0
    %1389 = vmatpush1.msra.mxu0 %v80
    %1390 = vmatprep.subr.mxu0 0.0
    %1391 = vmatpush1.msra.mxu0 %v83
    %1392 = vmatprep.subr.mxu0 0.0
    %1393 = vmatpush1.msra.mxu0 %v86
    %1394 = vmatprep.subr.mxu0 0.0
    %1395 = vmatpush1.msra.mxu0 %v89
    %1396 = vmatprep.subr.mxu0 0.0
    %1397 = vmatpush1.msra.mxu0 %v92
    %1398 = vmatprep.subr.mxu0 0.0
    %1399 = vmatpush1.msra.mxu0 %v95
    %1400 = vmatprep.subr.mxu0 0.0
    %1401 = vmatpush1.msra.mxu0 0.0
    %1402 = vmatprep.subr.mxu0 0.0
    %1403 = vmatpush1.msra.mxu0 0.0
    %1404 = vmatprep.subr.mxu0 0.0
    %1405 = vmatpush1.msra.mxu0 0.0
    %1406 = vmatprep.subr.mxu0 0.0
    %1407 = vmatpush1.msra.mxu0 0.0
    %1408 = vmatprep.subr.mxu0 0.0
    %1409 = vmatpush1.msra.mxu0 0.0
    %1410 = vmatprep.subr.mxu0 0.0
    %1411 = vmatpush1.msra.mxu0 0.0
    %1412 = vmatprep.subr.mxu0 0.0
    %1413 = vmatpush1.msra.mxu0 0.0
    %1414 = vmatprep.subr.mxu0 0.0
    %1415 = vmatpush1.msra.mxu0 0.0
    %1416 = vmatprep.subr.mxu0 0.0
    %1417 = vmatpush1.msra.mxu0 0.0
    %1418 = vmatprep.subr.mxu0 0.0
    %1419 = vmatpush1.msra.mxu0 0.0
    %1420 = vmatprep.subr.mxu0 0.0
    %1421 = vmatpush1.msra.mxu0 0.0
    %1422 = vmatprep.subr.mxu0 0.0
    %1423 = vmatpush1.msra.mxu0 0.0
    %1424 = vmatprep.subr.mxu0 0.0
    %1425 = vmatpush1.msra.mxu0 0.0
    %1426 = vmatprep.subr.mxu0 0.0
    %1427 = vmatpush1.msra.mxu0 0.0
    %1428 = vmatprep.subr.mxu0 0.0
    %1429 = vmatpush1.msra.mxu0 0.0
    %1430 = vmatprep.subr.mxu0 0.0
    %1431 = vmatpush1.msra.mxu0 0.0
    %1432 = vmatprep.mubr.f32.mxu0 0.0
    %1433 = vmatmul.mubr.f32.gmra.mrb[0].mxu0 0.0
    %v1434 = vpop.f32.mrb[0].mxu0
    %v1435 = vadd.f32 %v1293, %v1434
    %v1436 = vpop.f32.mrb[0].mxu0
    %1437 = vdwg.mxu0
    %v1438 = vadd.f32 %v185, %v1364
    %v1439 = vadd.f32 %v187, %v1366
    %v1440 = vxor.u32 %v1438, 2147483648
    %v1441 = vxor.u32 %v1439, 2147483648
    %v1442 = vmul.f32 %v1440, 1.442695
    %v1443 = vpow.pop %v1442
    %v1444 = vmul.f32 %v1441, 1.442695
    %v1445 = vpow.pop %v1444
    %v1446 = vadd.f32 %v1443, 1.0
    %v1447 = vadd.f32 %v1445, 1.0
    %v1448 = vrcp.pop %v1446
    %v1449 = vmul.f32 1.0, %v1448
    %v1450 = vrcp.pop %v1447
    %v1451 = vmul.f32 1.0, %v1450
    %v1452 = vmul.f32 %v1449, %v1435
    %v1453 = vadd.f32 %v256, %v1452
    %v1454 = vtanh.pop %v1453
    %v1455 = vsub.f32 1.0, %v1451
    %v1456 = vmul.f32 %v1455, %v1454
    %v1457 = vmul.f32 %v1451, 0.0
    %v1458 = vadd.f32 %v1456, %v1457
    %1459 = vmatprep.subr.mxu0 %v49
    %1460 = vmatpush1.msra.mxu0 %v48
    %1461 = vmatprep.subr.mxu0 %v52
    %1462 = vmatpush1.msra.mxu0 %v51
    %1463 = vmatprep.subr.mxu0 %v55
    %1464 = vmatpush1.msra.mxu0 %v54
    %1465 = vmatprep.subr.mxu0 %v58
    %1466 = vmatpush1.msra.mxu0 %v57
    %1467 = vmatprep.subr.mxu0 %v61
    %1468 = vmatpush1.msra.mxu0 %v60
    %1469 = vmatprep.subr.mxu0 %v64
    %1470 = vmatpush1.msra.mxu0 %v63
    %1471 = vmatprep.subr.mxu0 %v67
    %1472 = vmatpush1.msra.mxu0 %v66
    %1473 = vmatprep.subr.mxu0 %v70
    %1474 = vmatpush1.msra.mxu0 %v69
    %1475 = vmatprep.subr.mxu0 %v73
    %1476 = vmatpush1.msra.mxu0 %v72
    %1477 = vmatprep.subr.mxu0 %v76
    %1478 = vmatpush1.msra.mxu0 %v75
    %1479 = vmatprep.subr.mxu0 %v79
    %1480 = vmatpush1.msra.mxu0 %v78
    %1481 = vmatprep.subr.mxu0 %v82
    %1482 = vmatpush1.msra.mxu0 %v81
    %1483 = vmatprep.subr.mxu0 %v85
    %1484 = vmatpush1.msra.mxu0 %v84
    %1485 = vmatprep.subr.mxu0 %v88
    %1486 = vmatpush1.msra.mxu0 %v87
    %1487 = vmatprep.subr.mxu0 %v91
    %1488 = vmatpush1.msra.mxu0 %v90
    %1489 = vmatprep.subr.mxu0 %v94
    %1490 = vmatpush1.msra.mxu0 %v93
    %1491 = vmatprep.subr.mxu0 0.0
    %1492 = vmatpush1.msra.mxu0 0.0
    %1493 = vmatprep.subr.mxu0 0.0
    %1494 = vmatpush1.msra.mxu0 0.0
    %1495 = vmatprep.subr.mxu0 0.0
    %1496 = vmatpush1.msra.mxu0 0.0
    %1497 = vmatprep.subr.mxu0 0.0
    %1498 = vmatpush1.msra.mxu0 0.0
    %1499 = vmatprep.subr.mxu0 0.0
    %1500 = vmatpush1.msra.mxu0 0.0
    %1501 = vmatprep.subr.mxu0 0.0
    %1502 = vmatpush1.msra.mxu0 0.0
    %1503 = vmatprep.subr.mxu0 0.0
    %1504 = vmatpush1.msra.mxu0 0.0
    %1505 = vmatprep.subr.mxu0 0.0
    %1506 = vmatpush1.msra.mxu0 0.0
    %1507 = vmatprep.subr.mxu0 0.0
    %1508 = vmatpush1.msra.mxu0 0.0
    %1509 = vmatprep.subr.mxu0 0.0
    %1510 = vmatpush1.msra.mxu0 0.0
    %1511 = vmatprep.subr.mxu0 0.0
    %1512 = vmatpush1.msra.mxu0 0.0
    %1513 = vmatprep.subr.mxu0 0.0
    %1514 = vmatpush1.msra.mxu0 0.0
    %1515 = vmatprep.subr.mxu0 0.0
    %1516 = vmatpush1.msra.mxu0 0.0
    %1517 = vmatprep.subr.mxu0 0.0
    %1518 = vmatpush1.msra.mxu0 0.0
    %1519 = vmatprep.subr.mxu0 0.0
    %1520 = vmatpush1.msra.mxu0 0.0
    %1521 = vmatprep.subr.mxu0 0.0
    %1522 = vmatpush1.msra.mxu0 0.0
    %1523 = vmatprep.mubr.f32.mxu0 0.0
    %1524 = vmatmul.mubr.f32.gmra.mrb[0].mxu0 %v1458
    %v1525 = vpop.f32.mrb[0].mxu0
    %v1526 = vadd.f32 %v1285, %v1525
    %v1527 = vpop.f32.mrb[0].mxu0
    %v1528 = vadd.f32 %v1289, %v1527
    %1529 = vdwg.mxu0
    %1530 = vmatprep.subr.mxu0 0.0
    %1531 = vmatpush1.msra.mxu0 %v50
    %1532 = vmatprep.subr.mxu0 0.0
    %1533 = vmatpush1.msra.mxu0 %v53
    %1534 = vmatprep.subr.mxu0 0.0
    %1535 = vmatpush1.msra.mxu0 %v56
    %1536 = vmatprep.subr.mxu0 0.0
    %1537 = vmatpush1.msra.mxu0 %v59
    %1538 = vmatprep.subr.mxu0 0.0
    %1539 = vmatpush1.msra.mxu0 %v62
    %1540 = vmatprep.subr.mxu0 0.0
    %1541 = vmatpush1.msra.mxu0 %v65
    %1542 = vmatprep.subr.mxu0 0.0
    %1543 = vmatpush1.msra.mxu0 %v68
    %1544 = vmatprep.subr.mxu0 0.0
    %1545 = vmatpush1.msra.mxu0 %v71
    %1546 = vmatprep.subr.mxu0 0.0
    %1547 = vmatpush1.msra.mxu0 %v74
    %1548 = vmatprep.subr.mxu0 0.0
    %1549 = vmatpush1.msra.mxu0 %v77
    %1550 = vmatprep.subr.mxu0 0.0
    %1551 = vmatpush1.msra.mxu0 %v80
    %1552 = vmatprep.subr.mxu0 0.0
    %1553 = vmatpush1.msra.mxu0 %v83
    %1554 = vmatprep.subr.mxu0 0.0
    %1555 = vmatpush1.msra.mxu0 %v86
    %1556 = vmatprep.subr.mxu0 0.0
    %1557 = vmatpush1.msra.mxu0 %v89
    %1558 = vmatprep.subr.mxu0 0.0
    %1559 = vmatpush1.msra.mxu0 %v92
    %1560 = vmatprep.subr.mxu0 0.0
    %1561 = vmatpush1.msra.mxu0 %v95
    %1562 = vmatprep.subr.mxu0 0.0
    %1563 = vmatpush1.msra.mxu0 0.0
    %1564 = vmatprep.subr.mxu0 0.0
    %1565 = vmatpush1.msra.mxu0 0.0
    %1566 = vmatprep.subr.mxu0 0.0
    %1567 = vmatpush1.msra.mxu0 0.0
    %1568 = vmatprep.subr.mxu0 0.0
    %1569 = vmatpush1.msra.mxu0 0.0
    %1570 = vmatprep.subr.mxu0 0.0
    %1571 = vmatpush1.msra.mxu0 0.0
    %1572 = vmatprep.subr.mxu0 0.0
    %1573 = vmatpush1.msra.mxu0 0.0
    %1574 = vmatprep.subr.mxu0 0.0
    %1575 = vmatpush1.msra.mxu0 0.0
    %1576 = vmatprep.subr.mxu0 0.0
    %1577 = vmatpush1.msra.mxu0 0.0
    %1578 = vmatprep.subr.mxu0 0.0
    %1579 = vmatpush1.msra.mxu0 0.0
    %1580 = vmatprep.subr.mxu0 0.0
    %1581 = vmatpush1.msra.mxu0 0.0
    %1582 = vmatprep.subr.mxu0 0.0
    %1583 = vmatpush1.msra.mxu0 0.0
    %1584 = vmatprep.subr.mxu0 0.0
    %1585 = vmatpush1.msra.mxu0 0.0
    %1586 = vmatprep.subr.mxu0 0.0
    %1587 = vmatpush1.msra.mxu0 0.0
    %1588 = vmatprep.subr.mxu0 0.0
    %1589 = vmatpush1.msra.mxu0 0.0
    %1590 = vmatprep.subr.mxu0 0.0
    %1591 = vmatpush1.msra.mxu0 0.0
    %1592 = vmatprep.subr.mxu0 0.0
    %1593 = vmatpush1.msra.mxu0 0.0
    %1594 = vmatprep.mubr.f32.mxu0 0.0
    %1595 = vmatmul.mubr.f32.gmra.mrb[0].mxu0 %v1458
    %v1596 = vpop.f32.mrb[0].mxu0
    %v1597 = vadd.f32 %v1293, %v1596
    %v1598 = vpop.f32.mrb[0].mxu0
    %1599 = vdwg.mxu0
    %v1600 = vadd.f32 %v331, %v1526
    %v1601 = vadd.f32 %v333, %v1528
    %v1602 = vxor.u32 %v1600, 2147483648
    %v1603 = vxor.u32 %v1601, 2147483648
    %v1604 = vmul.f32 %v1602, 1.442695
    %v1605 = vpow.pop %v1604
    %v1606 = vmul.f32 %v1603, 1.442695
    %v1607 = vpow.pop %v1606
    %v1608 = vadd.f32 %v1605, 1.0
    %v1609 = vadd.f32 %v1607, 1.0
    %v1610 = vrcp.pop %v1608
    %v1611 = vmul.f32 1.0, %v1610
    %v1612 = vrcp.pop %v1609
    %v1613 = vmul.f32 1.0, %v1612
    %v1614 = vmul.f32 %v1611, %v1597
    %v1615 = vadd.f32 %v402, %v1614
    %v1616 = vtanh.pop %v1615
    %v1617 = vsub.f32 1.0, %v1613
    %v1618 = vmul.f32 %v1617, %v1616
    %v1619 = vmul.f32 %v1613, %v1458
    %v1620 = vadd.f32 %v1618, %v1619
    %1621 = vmatprep.subr.mxu0 %v49
    %1622 = vmatpush1.msra.mxu0 %v48
    %1623 = vmatprep.subr.mxu0 %v52
    %1624 = vmatpush1.msra.mxu0 %v51
    %1625 = vmatprep.subr.mxu0 %v55
    %1626 = vmatpush1.msra.mxu0 %v54
    %1627 = vmatprep.subr.mxu0 %v58
    %1628 = vmatpush1.msra.mxu0 %v57
    %1629 = vmatprep.subr.mxu0 %v61
    %1630 = vmatpush1.msra.mxu0 %v60
    %1631 = vmatprep.subr.mxu0 %v64
    %1632 = vmatpush1.msra.mxu0 %v63
    %1633 = vmatprep.subr.mxu0 %v67
    %1634 = vmatpush1.msra.mxu0 %v66
    %1635 = vmatprep.subr.mxu0 %v70
    %1636 = vmatpush1.msra.mxu0 %v69
    %1637 = vmatprep.subr.mxu0 %v73
    %1638 = vmatpush1.msra.mxu0 %v72
    %1639 = vmatprep.subr.mxu0 %v76
    %1640 = vmatpush1.msra.mxu0 %v75
    %1641 = vmatprep.subr.mxu0 %v79
    %1642 = vmatpush1.msra.mxu0 %v78
    %1643 = vmatprep.subr.mxu0 %v82
    %1644 = vmatpush1.msra.mxu0 %v81
    %1645 = vmatprep.subr.mxu0 %v85
    %1646 = vmatpush1.msra.mxu0 %v84
    %1647 = vmatprep.subr.mxu0 %v88
    %1648 = vmatpush1.msra.mxu0 %v87
    %1649 = vmatprep.subr.mxu0 %v91
    %1650 = vmatpush1.msra.mxu0 %v90
    %1651 = vmatprep.subr.mxu0 %v94
    %1652 = vmatpush1.msra.mxu0 %v93
    %1653 = vmatprep.subr.mxu0 0.0
    %1654 = vmatpush1.msra.mxu0 0.0
    %1655 = vmatprep.subr.mxu0 0.0
    %1656 = vmatpush1.msra.mxu0 0.0
    %1657 = vmatprep.subr.mxu0 0.0
    %1658 = vmatpush1.msra.mxu0 0.0
    %1659 = vmatprep.subr.mxu0 0.0
    %1660 = vmatpush1.msra.mxu0 0.0
    %1661 = vmatprep.subr.mxu0 0.0
    %1662 = vmatpush1.msra.mxu0 0.0
    %1663 = vmatprep.subr.mxu0 0.0
    %1664 = vmatpush1.msra.mxu0 0.0
    %1665 = vmatprep.subr.mxu0 0.0
    %1666 = vmatpush1.msra.mxu0 0.0
    %1667 = vmatprep.subr.mxu0 0.0
    %1668 = vmatpush1.msra.mxu0 0.0
    %1669 = vmatprep.subr.mxu0 0.0
    %1670 = vmatpush1.msra.mxu0 0.0
    %1671 = vmatprep.subr.mxu0 0.0
    %1672 = vmatpush1.msra.mxu0 0.0
    %1673 = vmatprep.subr.mxu0 0.0
    %1674 = vmatpush1.msra.mxu0 0.0
    %1675 = vmatprep.subr.mxu0 0.0
    %1676 = vmatpush1.msra.mxu0 0.0
    %1677 = vmatprep.subr.mxu0 0.0
    %1678 = vmatpush1.msra.mxu0 0.0
    %1679 = vmatprep.subr.mxu0 0.0
    %1680 = vmatpush1.msra.mxu0 0.0
    %1681 = vmatprep.subr.mxu0 0.0
    %1682 = vmatpush1.msra.mxu0 0.0
    %1683 = vmatprep.subr.mxu0 0.0
    %1684 = vmatpush1.msra.mxu0 0.0
    %1685 = vmatprep.mubr.f32.mxu0 0.0
    %1686 = vmatmul.mubr.f32.gmra.mrb[0].mxu0 %v1620
    %v1687 = vpop.f32.mrb[0].mxu0
    %v1688 = vadd.f32 %v1285, %v1687
    %v1689 = vpop.f32.mrb[0].mxu0
    %v1690 = vadd.f32 %v1289, %v1689
    %1691 = vdwg.mxu0
    %1692 = vmatprep.subr.mxu0 0.0
    %1693 = vmatpush1.msra.mxu0 %v50
    %1694 = vmatprep.subr.mxu0 0.0
    %1695 = vmatpush1.msra.mxu0 %v53
    %1696 = vmatprep.subr.mxu0 0.0
    %1697 = vmatpush1.msra.mxu0 %v56
    %1698 = vmatprep.subr.mxu0 0.0
    %1699 = vmatpush1.msra.mxu0 %v59
    %1700 = vmatprep.subr.mxu0 0.0
    %1701 = vmatpush1.msra.mxu0 %v62
    %1702 = vmatprep.subr.mxu0 0.0
    %1703 = vmatpush1.msra.mxu0 %v65
    %1704 = vmatprep.subr.mxu0 0.0
    %1705 = vmatpush1.msra.mxu0 %v68
    %1706 = vmatprep.subr.mxu0 0.0
    %1707 = vmatpush1.msra.mxu0 %v71
    %1708 = vmatprep.subr.mxu0 0.0
    %1709 = vmatpush1.msra.mxu0 %v74
    %1710 = vmatprep.subr.mxu0 0.0
    %1711 = vmatpush1.msra.mxu0 %v77
    %1712 = vmatprep.subr.mxu0 0.0
    %1713 = vmatpush1.msra.mxu0 %v80
    %1714 = vmatprep.subr.mxu0 0.0
    %1715 = vmatpush1.msra.mxu0 %v83
    %1716 = vmatprep.subr.mxu0 0.0
    %1717 = vmatpush1.msra.mxu0 %v86
    %1718 = vmatprep.subr.mxu0 0.0
    %1719 = vmatpush1.msra.mxu0 %v89
    %1720 = vmatprep.subr.mxu0 0.0
    %1721 = vmatpush1.msra.mxu0 %v92
    %1722 = vmatprep.subr.mxu0 0.0
    %1723 = vmatpush1.msra.mxu0 %v95
    %1724 = vmatprep.subr.mxu0 0.0
    %1725 = vmatpush1.msra.mxu0 0.0
    %1726 = vmatprep.subr.mxu0 0.0
    %1727 = vmatpush1.msra.mxu0 0.0
    %1728 = vmatprep.subr.mxu0 0.0
    %1729 = vmatpush1.msra.mxu0 0.0
    %1730 = vmatprep.subr.mxu0 0.0
    %1731 = vmatpush1.msra.mxu0 0.0
    %1732 = vmatprep.subr.mxu0 0.0
    %1733 = vmatpush1.msra.mxu0 0.0
    %1734 = vmatprep.subr.mxu0 0.0
    %1735 = vmatpush1.msra.mxu0 0.0
    %1736 = vmatprep.subr.mxu0 0.0
    %1737 = vmatpush1.msra.mxu0 0.0
    %1738 = vmatprep.subr.mxu0 0.0
    %1739 = vmatpush1.msra.mxu0 0.0
    %1740 = vmatprep.subr.mxu0 0.0
    %1741 = vmatpush1.msra.mxu0 0.0
    %1742 = vmatprep.subr.mxu0 0.0
    %1743 = vmatpush1.msra.mxu0 0.0
    %1744 = vmatprep.subr.mxu0 0.0
    %1745 = vmatpush1.msra.mxu0 0.0
    %1746 = vmatprep.subr.mxu0 0.0
    %1747 = vmatpush1.msra.mxu0 0.0
    %1748 = vmatprep.subr.mxu0 0.0
    %1749 = vmatpush1.msra.mxu0 0.0
    %1750 = vmatprep.subr.mxu0 0.0
    %1751 = vmatpush1.msra.mxu0 0.0
    %1752 = vmatprep.subr.mxu0 0.0
    %1753 = vmatpush1.msra.mxu0 0.0
    %1754 = vmatprep.subr.mxu0 0.0
    %1755 = vmatpush1.msra.mxu0 0.0
    %1756 = vmatprep.mubr.f32.mxu0 0.0
    %1757 = vmatmul.mubr.f32.gmra.mrb[0].mxu0 %v1620
    %v1758 = vpop.f32.mrb[0].mxu0
    %v1759 = vadd.f32 %v1293, %v1758
    %v1760 = vpop.f32.mrb[0].mxu0
    %1761 = vdwg.mxu0
    %v1762 = vadd.f32 %v477, %v1688
    %v1763 = vadd.f32 %v479, %v1690
    %v1764 = vxor.u32 %v1762, 2147483648
    %v1765 = vxor.u32 %v1763, 2147483648
    %v1766 = vmul.f32 %v1764, 1.442695
    %v1767 = vpow.pop %v1766
    %v1768 = vmul.f32 %v1765, 1.442695
    %v1769 = vpow.pop %v1768
    %v1770 = vadd.f32 %v1767, 1.0
    %v1771 = vadd.f32 %v1769, 1.0
    %v1772 = vrcp.pop %v1770
    %v1773 = vmul.f32 1.0, %v1772
    %v1774 = vrcp.pop %v1771
    %v1775 = vmul.f32 1.0, %v1774
    %v1776 = vmul.f32 %v1773, %v1759
    %v1777 = vadd.f32 %v548, %v1776
    %v1778 = vtanh.pop %v1777
    %v1779 = vsub.f32 1.0, %v1775
    %v1780 = vmul.f32 %v1779, %v1778
    %v1781 = vmul.f32 %v1775, %v1620
    %v1782 = vadd.f32 %v1780, %v1781
    %1783 = vmatprep.subr.mxu0 %v49
    %1784 = vmatpush1.msra.mxu0 %v48
    %1785 = vmatprep.subr.mxu0 %v52
    %1786 = vmatpush1.msra.mxu0 %v51
    %1787 = vmatprep.subr.mxu0 %v55
    %1788 = vmatpush1.msra.mxu0 %v54
    %1789 = vmatprep.subr.mxu0 %v58
    %1790 = vmatpush1.msra.mxu0 %v57
    %1791 = vmatprep.subr.mxu0 %v61
    %1792 = vmatpush1.msra.mxu0 %v60
    %1793 = vmatprep.subr.mxu0 %v64
    %1794 = vmatpush1.msra.mxu0 %v63
    %1795 = vmatprep.subr.mxu0 %v67
    %1796 = vmatpush1.msra.mxu0 %v66
    %1797 = vmatprep.subr.mxu0 %v70
    %1798 = vmatpush1.msra.mxu0 %v69
    %1799 = vmatprep.subr.mxu0 %v73
    %1800 = vmatpush1.msra.mxu0 %v72
    %1801 = vmatprep.subr.mxu0 %v76
    %1802 = vmatpush1.msra.mxu0 %v75
    %1803 = vmatprep.subr.mxu0 %v79
    %1804 = vmatpush1.msra.mxu0 %v78
    %1805 = vmatprep.subr.mxu0 %v82
    %1806 = vmatpush1.msra.mxu0 %v81
    %1807 = vmatprep.subr.mxu0 %v85
    %1808 = vmatpush1.msra.mxu0 %v84
    %1809 = vmatprep.subr.mxu0 %v88
    %1810 = vmatpush1.msra.mxu0 %v87
    %1811 = vmatprep.subr.mxu0 %v91
    %1812 = vmatpush1.msra.mxu0 %v90
    %1813 = vmatprep.subr.mxu0 %v94
    %1814 = vmatpush1.msra.mxu0 %v93
    %1815 = vmatprep.subr.mxu0 0.0
    %1816 = vmatpush1.msra.mxu0 0.0
    %1817 = vmatprep.subr.mxu0 0.0
    %1818 = vmatpush1.msra.mxu0 0.0
    %1819 = vmatprep.subr.mxu0 0.0
    %1820 = vmatpush1.msra.mxu0 0.0
    %1821 = vmatprep.subr.mxu0 0.0
    %1822 = vmatpush1.msra.mxu0 0.0
    %1823 = vmatprep.subr.mxu0 0.0
    %1824 = vmatpush1.msra.mxu0 0.0
    %1825 = vmatprep.subr.mxu0 0.0
    %1826 = vmatpush1.msra.mxu0 0.0
    %1827 = vmatprep.subr.mxu0 0.0
    %1828 = vmatpush1.msra.mxu0 0.0
    %1829 = vmatprep.subr.mxu0 0.0
    %1830 = vmatpush1.msra.mxu0 0.0
    %1831 = vmatprep.subr.mxu0 0.0
    %1832 = vmatpush1.msra.mxu0 0.0
    %1833 = vmatprep.subr.mxu0 0.0
    %1834 = vmatpush1.msra.mxu0 0.0
    %1835 = vmatprep.subr.mxu0 0.0
    %1836 = vmatpush1.msra.mxu0 0.0
    %1837 = vmatprep.subr.mxu0 0.0
    %1838 = vmatpush1.msra.mxu0 0.0
    %1839 = vmatprep.subr.mxu0 0.0
    %1840 = vmatpush1.msra.mxu0 0.0
    %1841 = vmatprep.subr.mxu0 0.0
    %1842 = vmatpush1.msra.mxu0 0.0
    %1843 = vmatprep.subr.mxu0 0.0
    %1844 = vmatpush1.msra.mxu0 0.0
    %1845 = vmatprep.subr.mxu0 0.0
    %1846 = vmatpush1.msra.mxu0 0.0
    %1847 = vmatprep.mubr.f32.mxu0 0.0
    %1848 = vmatmul.mubr.f32.gmra.mrb[0].mxu0 %v1782
    %v1849 = vpop.f32.mrb[0].mxu0
    %v1850 = vadd.f32 %v1285, %v1849
    %v1851 = vpop.f32.mrb[0].mxu0
    %v1852 = vadd.f32 %v1289, %v1851
    %1853 = vdwg.mxu0
    %1854 = vmatprep.subr.mxu0 0.0
    %1855 = vmatpush1.msra.mxu0 %v50
    %1856 = vmatprep.subr.mxu0 0.0
    %1857 = vmatpush1.msra.mxu0 %v53
    %1858 = vmatprep.subr.mxu0 0.0
    %1859 = vmatpush1.msra.mxu0 %v56
    %1860 = vmatprep.subr.mxu0 0.0
    %1861 = vmatpush1.msra.mxu0 %v59
    %1862 = vmatprep.subr.mxu0 0.0
    %1863 = vmatpush1.msra.mxu0 %v62
    %1864 = vmatprep.subr.mxu0 0.0
    %1865 = vmatpush1.msra.mxu0 %v65
    %1866 = vmatprep.subr.mxu0 0.0
    %1867 = vmatpush1.msra.mxu0 %v68
    %1868 = vmatprep.subr.mxu0 0.0
    %1869 = vmatpush1.msra.mxu0 %v71
    %1870 = vmatprep.subr.mxu0 0.0
    %1871 = vmatpush1.msra.mxu0 %v74
    %1872 = vmatprep.subr.mxu0 0.0
    %1873 = vmatpush1.msra.mxu0 %v77
    %1874 = vmatprep.subr.mxu0 0.0
    %1875 = vmatpush1.msra.mxu0 %v80
    %1876 = vmatprep.subr.mxu0 0.0
    %1877 = vmatpush1.msra.mxu0 %v83
    %1878 = vmatprep.subr.mxu0 0.0
    %1879 = vmatpush1.msra.mxu0 %v86
    %1880 = vmatprep.subr.mxu0 0.0
    %1881 = vmatpush1.msra.mxu0 %v89
    %1882 = vmatprep.subr.mxu0 0.0
    %1883 = vmatpush1.msra.mxu0 %v92
    %1884 = vmatprep.subr.mxu0 0.0
    %1885 = vmatpush1.msra.mxu0 %v95
    %1886 = vmatprep.subr.mxu0 0.0
    %1887 = vmatpush1.msra.mxu0 0.0
    %1888 = vmatprep.subr.mxu0 0.0
    %1889 = vmatpush1.msra.mxu0 0.0
    %1890 = vmatprep.subr.mxu0 0.0
    %1891 = vmatpush1.msra.mxu0 0.0
    %1892 = vmatprep.subr.mxu0 0.0
    %1893 = vmatpush1.msra.mxu0 0.0
    %1894 = vmatprep.subr.mxu0 0.0
    %1895 = vmatpush1.msra.mxu0 0.0
    %1896 = vmatprep.subr.mxu0 0.0
    %1897 = vmatpush1.msra.mxu0 0.0
    %1898 = vmatprep.subr.mxu0 0.0
    %1899 = vmatpush1.msra.mxu0 0.0
    %1900 = vmatprep.subr.mxu0 0.0
    %1901 = vmatpush1.msra.mxu0 0.0
    %1902 = vmatprep.subr.mxu0 0.0
    %1903 = vmatpush1.msra.mxu0 0.0
    %1904 = vmatprep.subr.mxu0 0.0
    %1905 = vmatpush1.msra.mxu0 0.0
    %1906 = vmatprep.subr.mxu0 0.0
    %1907 = vmatpush1.msra.mxu0 0.0
    %1908 = vmatprep.subr.mxu0 0.0
    %1909 = vmatpush1.msra.mxu0 0.0
    %1910 = vmatprep.subr.mxu0 0.0
    %1911 = vmatpush1.msra.mxu0 0.0
    %1912 = vmatprep.subr.mxu0 0.0
    %1913 = vmatpush1.msra.mxu0 0.0
    %1914 = vmatprep.subr.mxu0 0.0
    %1915 = vmatpush1.msra.mxu0 0.0
    %1916 = vmatprep.subr.mxu0 0.0
    %1917 = vmatpush1.msra.mxu0 0.0
    %1918 = vmatprep.mubr.f32.mxu0 0.0
    %1919 = vmatmul.mubr.f32.gmra.mrb[0].mxu0 %v1782
    %v1920 = vpop.f32.mrb[0].mxu0
    %v1921 = vadd.f32 %v1293, %v1920
    %v1922 = vpop.f32.mrb[0].mxu0
    %1923 = vdwg.mxu0
    %v1924 = vadd.f32 %v623, %v1850
    %v1925 = vadd.f32 %v625, %v1852
    %v1926 = vxor.u32 %v1924, 2147483648
    %v1927 = vxor.u32 %v1925, 2147483648
    %v1928 = vmul.f32 %v1926, 1.442695
    %v1929 = vpow.pop %v1928
    %v1930 = vmul.f32 %v1927, 1.442695
    %v1931 = vpow.pop %v1930
    %v1932 = vadd.f32 %v1929, 1.0
    %v1933 = vadd.f32 %v1931, 1.0
    %v1934 = vrcp.pop %v1932
    %v1935 = vmul.f32 1.0, %v1934
    %v1936 = vrcp.pop %v1933
    %v1937 = vmul.f32 1.0, %v1936
    %v1938 = vmul.f32 %v1935, %v1921
    %v1939 = vadd.f32 %v694, %v1938
    %v1940 = vtanh.pop %v1939
    %v1941 = vsub.f32 1.0, %v1937
    %v1942 = vmul.f32 %v1941, %v1940
    %v1943 = vmul.f32 %v1937, %v1782
    %v1944 = vadd.f32 %v1942, %v1943
    %1945 = vmatprep.subr.mxu0 %v49
    %1946 = vmatpush1.msra.mxu0 %v48
    %1947 = vmatprep.subr.mxu0 %v52
    %1948 = vmatpush1.msra.mxu0 %v51
    %1949 = vmatprep.subr.mxu0 %v55
    %1950 = vmatpush1.msra.mxu0 %v54
    %1951 = vmatprep.subr.mxu0 %v58
    %1952 = vmatpush1.msra.mxu0 %v57
    %1953 = vmatprep.subr.mxu0 %v61
    %1954 = vmatpush1.msra.mxu0 %v60
    %1955 = vmatprep.subr.mxu0 %v64
    %1956 = vmatpush1.msra.mxu0 %v63
    %1957 = vmatprep.subr.mxu0 %v67
    %1958 = vmatpush1.msra.mxu0 %v66
    %1959 = vmatprep.subr.mxu0 %v70
    %1960 = vmatpush1.msra.mxu0 %v69
    %1961 = vmatprep.subr.mxu0 %v73
    %1962 = vmatpush1.msra.mxu0 %v72
    %1963 = vmatprep.subr.mxu0 %v76
    %1964 = vmatpush1.msra.mxu0 %v75
    %1965 = vmatprep.subr.mxu0 %v79
    %1966 = vmatpush1.msra.mxu0 %v78
    %1967 = vmatprep.subr.mxu0 %v82
    %1968 = vmatpush1.msra.mxu0 %v81
    %1969 = vmatprep.subr.mxu0 %v85
    %1970 = vmatpush1.msra.mxu0 %v84
    %1971 = vmatprep.subr.mxu0 %v88
    %1972 = vmatpush1.msra.mxu0 %v87
    %1973 = vmatprep.subr.mxu0 %v91
    %1974 = vmatpush1.msra.mxu0 %v90
    %1975 = vmatprep.subr.mxu0 %v94
    %1976 = vmatpush1.msra.mxu0 %v93
    %1977 = vmatprep.subr.mxu0 0.0
    %1978 = vmatpush1.msra.mxu0 0.0
    %1979 = vmatprep.subr.mxu0 0.0
    %1980 = vmatpush1.msra.mxu0 0.0
    %1981 = vmatprep.subr.mxu0 0.0
    %1982 = vmatpush1.msra.mxu0 0.0
    %1983 = vmatprep.subr.mxu0 0.0
    %1984 = vmatpush1.msra.mxu0 0.0
    %1985 = vmatprep.subr.mxu0 0.0
    %1986 = vmatpush1.msra.mxu0 0.0
    %1987 = vmatprep.subr.mxu0 0.0
    %1988 = vmatpush1.msra.mxu0 0.0
    %1989 = vmatprep.subr.mxu0 0.0
    %1990 = vmatpush1.msra.mxu0 0.0
    %1991 = vmatprep.subr.mxu0 0.0
    %1992 = vmatpush1.msra.mxu0 0.0
    %1993 = vmatprep.subr.mxu0 0.0
    %1994 = vmatpush1.msra.mxu0 0.0
    %1995 = vmatprep.subr.mxu0 0.0
    %1996 = vmatpush1.msra.mxu0 0.0
    %1997 = vmatprep.subr.mxu0 0.0
    %1998 = vmatpush1.msra.mxu0 0.0
    %1999 = vmatprep.subr.mxu0 0.0
    %2000 = vmatpush1.msra.mxu0 0.0
    %2001 = vmatprep.subr.mxu0 0.0
    %2002 = vmatpush1.msra.mxu0 0.0
    %2003 = vmatprep.subr.mxu0 0.0
    %2004 = vmatpush1.msra.mxu0 0.0
    %2005 = vmatprep.subr.mxu0 0.0
    %2006 = vmatpush1.msra.mxu0 0.0
    %2007 = vmatprep.subr.mxu0 0.0
    %2008 = vmatpush1.msra.mxu0 0.0
    %2009 = vmatprep.mubr.f32.mxu0 0.0
    %2010 = vmatmul.mubr.f32.gmra.mrb[0].mxu0 %v1944
    %v2011 = vpop.f32.mrb[0].mxu0
    %v2012 = vadd.f32 %v1285, %v2011
    %v2013 = vpop.f32.mrb[0].mxu0
    %v2014 = vadd.f32 %v1289, %v2013
    %2015 = vdwg.mxu0
    %2016 = vmatprep.subr.mxu0 0.0
    %2017 = vmatpush1.msra.mxu0 %v50
    %2018 = vmatprep.subr.mxu0 0.0
    %2019 = vmatpush1.msra.mxu0 %v53
    %2020 = vmatprep.subr.mxu0 0.0
    %2021 = vmatpush1.msra.mxu0 %v56
    %2022 = vmatprep.subr.mxu0 0.0
    %2023 = vmatpush1.msra.mxu0 %v59
    %2024 = vmatprep.subr.mxu0 0.0
    %2025 = vmatpush1.msra.mxu0 %v62
    %2026 = vmatprep.subr.mxu0 0.0
    %2027 = vmatpush1.msra.mxu0 %v65
    %2028 = vmatprep.subr.mxu0 0.0
    %2029 = vmatpush1.msra.mxu0 %v68
    %2030 = vmatprep.subr.mxu0 0.0
    %2031 = vmatpush1.msra.mxu0 %v71
    %2032 = vmatprep.subr.mxu0 0.0
    %2033 = vmatpush1.msra.mxu0 %v74
    %2034 = vmatprep.subr.mxu0 0.0
    %2035 = vmatpush1.msra.mxu0 %v77
    %2036 = vmatprep.subr.mxu0 0.0
    %2037 = vmatpush1.msra.mxu0 %v80
    %2038 = vmatprep.subr.mxu0 0.0
    %2039 = vmatpush1.msra.mxu0 %v83
    %2040 = vmatprep.subr.mxu0 0.0
    %2041 = vmatpush1.msra.mxu0 %v86
    %2042 = vmatprep.subr.mxu0 0.0
    %2043 = vmatpush1.msra.mxu0 %v89
    %2044 = vmatprep.subr.mxu0 0.0
    %2045 = vmatpush1.msra.mxu0 %v92
    %2046 = vmatprep.subr.mxu0 0.0
    %2047 = vmatpush1.msra.mxu0 %v95
    %2048 = vmatprep.subr.mxu0 0.0
    %2049 = vmatpush1.msra.mxu0 0.0
    %2050 = vmatprep.subr.mxu0 0.0
    %2051 = vmatpush1.msra.mxu0 0.0
    %2052 = vmatprep.subr.mxu0 0.0
    %2053 = vmatpush1.msra.mxu0 0.0
    %2054 = vmatprep.subr.mxu0 0.0
    %2055 = vmatpush1.msra.mxu0 0.0
    %2056 = vmatprep.subr.mxu0 0.0
    %2057 = vmatpush1.msra.mxu0 0.0
    %2058 = vmatprep.subr.mxu0 0.0
    %2059 = vmatpush1.msra.mxu0 0.0
    %2060 = vmatprep.subr.mxu0 0.0
    %2061 = vmatpush1.msra.mxu0 0.0
    %2062 = vmatprep.subr.mxu0 0.0
    %2063 = vmatpush1.msra.mxu0 0.0
    %2064 = vmatprep.subr.mxu0 0.0
    %2065 = vmatpush1.msra.mxu0 0.0
    %2066 = vmatprep.subr.mxu0 0.0
    %2067 = vmatpush1.msra.mxu0 0.0
    %2068 = vmatprep.subr.mxu0 0.0
    %2069 = vmatpush1.msra.mxu0 0.0
    %2070 = vmatprep.subr.mxu0 0.0
    %2071 = vmatpush1.msra.mxu0 0.0
    %2072 = vmatprep.subr.mxu0 0.0
    %2073 = vmatpush1.msra.mxu0 0.0
    %2074 = vmatprep.subr.mxu0 0.0
    %2075 = vmatpush1.msra.mxu0 0.0
    %2076 = vmatprep.subr.mxu0 0.0
    %2077 = vmatpush1.msra.mxu0 0.0
    %2078 = vmatprep.subr.mxu0 0.0
    %2079 = vmatpush1.msra.mxu0 0.0
    %2080 = vmatprep.mubr.f32.mxu0 0.0
    %2081 = vmatmul.mubr.f32.gmra.mrb[0].mxu0 %v1944
    %v2082 = vpop.f32.mrb[0].mxu0
    %v2083 = vadd.f32 %v1293, %v2082
    %v2084 = vpop.f32.mrb[0].mxu0
    %2085 = vdwg.mxu0
    %v2086 = vadd.f32 %v769, %v2012
    %v2087 = vadd.f32 %v771, %v2014
    %v2088 = vxor.u32 %v2086, 2147483648
    %v2089 = vxor.u32 %v2087, 2147483648
    %v2090 = vmul.f32 %v2088, 1.442695
    %v2091 = vpow.pop %v2090
    %v2092 = vmul.f32 %v2089, 1.442695
    %v2093 = vpow.pop %v2092
    %v2094 = vadd.f32 %v2091, 1.0
    %v2095 = vadd.f32 %v2093, 1.0
    %v2096 = vrcp.pop %v2094
    %v2097 = vmul.f32 1.0, %v2096
    %v2098 = vrcp.pop %v2095
    %v2099 = vmul.f32 1.0, %v2098
    %v2100 = vmul.f32 %v2097, %v2083
    %v2101 = vadd.f32 %v840, %v2100
    %v2102 = vtanh.pop %v2101
    %v2103 = vsub.f32 1.0, %v2099
    %v2104 = vmul.f32 %v2103, %v2102
    %v2105 = vmul.f32 %v2099, %v1944
    %v2106 = vadd.f32 %v2104, %v2105
    %2107 = vmatprep.subr.mxu0 %v49
    %2108 = vmatpush1.msra.mxu0 %v48
    %2109 = vmatprep.subr.mxu0 %v52
    %2110 = vmatpush1.msra.mxu0 %v51
    %2111 = vmatprep.subr.mxu0 %v55
    %2112 = vmatpush1.msra.mxu0 %v54
    %2113 = vmatprep.subr.mxu0 %v58
    %2114 = vmatpush1.msra.mxu0 %v57
    %2115 = vmatprep.subr.mxu0 %v61
    %2116 = vmatpush1.msra.mxu0 %v60
    %2117 = vmatprep.subr.mxu0 %v64
    %2118 = vmatpush1.msra.mxu0 %v63
    %2119 = vmatprep.subr.mxu0 %v67
    %2120 = vmatpush1.msra.mxu0 %v66
    %2121 = vmatprep.subr.mxu0 %v70
    %2122 = vmatpush1.msra.mxu0 %v69
    %2123 = vmatprep.subr.mxu0 %v73
    %2124 = vmatpush1.msra.mxu0 %v72
    %2125 = vmatprep.subr.mxu0 %v76
    %2126 = vmatpush1.msra.mxu0 %v75
    %2127 = vmatprep.subr.mxu0 %v79
    %2128 = vmatpush1.msra.mxu0 %v78
    %2129 = vmatprep.subr.mxu0 %v82
    %2130 = vmatpush1.msra.mxu0 %v81
    %2131 = vmatprep.subr.mxu0 %v85
    %2132 = vmatpush1.msra.mxu0 %v84
    %2133 = vmatprep.subr.mxu0 %v88
    %2134 = vmatpush1.msra.mxu0 %v87
    %2135 = vmatprep.subr.mxu0 %v91
    %2136 = vmatpush1.msra.mxu0 %v90
    %2137 = vmatprep.subr.mxu0 %v94
    %2138 = vmatpush1.msra.mxu0 %v93
    %2139 = vmatprep.subr.mxu0 0.0
    %2140 = vmatpush1.msra.mxu0 0.0
    %2141 = vmatprep.subr.mxu0 0.0
    %2142 = vmatpush1.msra.mxu0 0.0
    %2143 = vmatprep.subr.mxu0 0.0
    %2144 = vmatpush1.msra.mxu0 0.0
    %2145 = vmatprep.subr.mxu0 0.0
    %2146 = vmatpush1.msra.mxu0 0.0
    %2147 = vmatprep.subr.mxu0 0.0
    %2148 = vmatpush1.msra.mxu0 0.0
    %2149 = vmatprep.subr.mxu0 0.0
    %2150 = vmatpush1.msra.mxu0 0.0
    %2151 = vmatprep.subr.mxu0 0.0
    %2152 = vmatpush1.msra.mxu0 0.0
    %2153 = vmatprep.subr.mxu0 0.0
    %2154 = vmatpush1.msra.mxu0 0.0
    %2155 = vmatprep.subr.mxu0 0.0
    %2156 = vmatpush1.msra.mxu0 0.0
    %2157 = vmatprep.subr.mxu0 0.0
    %2158 = vmatpush1.msra.mxu0 0.0
    %2159 = vmatprep.subr.mxu0 0.0
    %2160 = vmatpush1.msra.mxu0 0.0
    %2161 = vmatprep.subr.mxu0 0.0
    %2162 = vmatpush1.msra.mxu0 0.0
    %2163 = vmatprep.subr.mxu0 0.0
    %2164 = vmatpush1.msra.mxu0 0.0
    %2165 = vmatprep.subr.mxu0 0.0
    %2166 = vmatpush1.msra.mxu0 0.0
    %2167 = vmatprep.subr.mxu0 0.0
    %2168 = vmatpush1.msra.mxu0 0.0
    %2169 = vmatprep.subr.mxu0 0.0
    %2170 = vmatpush1.msra.mxu0 0.0
    %2171 = vmatprep.mubr.f32.mxu0 0.0
    %2172 = vmatmul.mubr.f32.gmra.mrb[0].mxu0 %v2106
    %v2173 = vpop.f32.mrb[0].mxu0
    %v2174 = vadd.f32 %v1285, %v2173
    %v2175 = vpop.f32.mrb[0].mxu0
    %v2176 = vadd.f32 %v1289, %v2175
    %2177 = vdwg.mxu0
    %2178 = vmatprep.subr.mxu0 0.0
    %2179 = vmatpush1.msra.mxu0 %v50
    %2180 = vmatprep.subr.mxu0 0.0
    %2181 = vmatpush1.msra.mxu0 %v53
    %2182 = vmatprep.subr.mxu0 0.0
    %2183 = vmatpush1.msra.mxu0 %v56
    %2184 = vmatprep.subr.mxu0 0.0
    %2185 = vmatpush1.msra.mxu0 %v59
    %2186 = vmatprep.subr.mxu0 0.0
    %2187 = vmatpush1.msra.mxu0 %v62
    %2188 = vmatprep.subr.mxu0 0.0
    %2189 = vmatpush1.msra.mxu0 %v65
    %2190 = vmatprep.subr.mxu0 0.0
    %2191 = vmatpush1.msra.mxu0 %v68
    %2192 = vmatprep.subr.mxu0 0.0
    %2193 = vmatpush1.msra.mxu0 %v71
    %2194 = vmatprep.subr.mxu0 0.0
    %2195 = vmatpush1.msra.mxu0 %v74
    %2196 = vmatprep.subr.mxu0 0.0
    %2197 = vmatpush1.msra.mxu0 %v77
    %2198 = vmatprep.subr.mxu0 0.0
    %2199 = vmatpush1.msra.mxu0 %v80
    %2200 = vmatprep.subr.mxu0 0.0
    %2201 = vmatpush1.msra.mxu0 %v83
    %2202 = vmatprep.subr.mxu0 0.0
    %2203 = vmatpush1.msra.mxu0 %v86
    %2204 = vmatprep.subr.mxu0 0.0
    %2205 = vmatpush1.msra.mxu0 %v89
    %2206 = vmatprep.subr.mxu0 0.0
    %2207 = vmatpush1.msra.mxu0 %v92
    %2208 = vmatprep.subr.mxu0 0.0
    %2209 = vmatpush1.msra.mxu0 %v95
    %2210 = vmatprep.subr.mxu0 0.0
    %2211 = vmatpush1.msra.mxu0 0.0
    %2212 = vmatprep.subr.mxu0 0.0
    %2213 = vmatpush1.msra.mxu0 0.0
    %2214 = vmatprep.subr.mxu0 0.0
    %2215 = vmatpush1.msra.mxu0 0.0
    %2216 = vmatprep.subr.mxu0 0.0
    %2217 = vmatpush1.msra.mxu0 0.0
    %2218 = vmatprep.subr.mxu0 0.0
    %2219 = vmatpush1.msra.mxu0 0.0
    %2220 = vmatprep.subr.mxu0 0.0
    %2221 = vmatpush1.msra.mxu0 0.0
    %2222 = vmatprep.subr.mxu0 0.0
    %2223 = vmatpush1.msra.mxu0 0.0
    %2224 = vmatprep.subr.mxu0 0.0
    %2225 = vmatpush1.msra.mxu0 0.0
    %2226 = vmatprep.subr.mxu0 0.0
    %2227 = vmatpush1.msra.mxu0 0.0
    %2228 = vmatprep.subr.mxu0 0.0
    %2229 = vmatpush1.msra.mxu0 0.0
    %2230 = vmatprep.subr.mxu0 0.0
    %2231 = vmatpush1.msra.mxu0 0.0
    %2232 = vmatprep.subr.mxu0 0.0
    %2233 = vmatpush1.msra.mxu0 0.0
    %2234 = vmatprep.subr.mxu0 0.0
    %2235 = vmatpush1.msra.mxu0 0.0
    %2236 = vmatprep.subr.mxu0 0.0
    %2237 = vmatpush1.msra.mxu0 0.0
    %2238 = vmatprep.subr.mxu0 0.0
    %2239 = vmatpush1.msra.mxu0 0.0
    %2240 = vmatprep.subr.mxu0 0.0
    %2241 = vmatpush1.msra.mxu0 0.0
    %2242 = vmatprep.mubr.f32.mxu0 0.0
    %2243 = vmatmul.mubr.f32.gmra.mrb[0].mxu0 %v2106
    %v2244 = vpop.f32.mrb[0].mxu0
    %v2245 = vadd.f32 %v1293, %v2244
    %v2246 = vpop.f32.mrb[0].mxu0
    %2247 = vdwg.mxu0
    %v2248 = vadd.f32 %v915, %v2174
    %v2249 = vadd.f32 %v917, %v2176
    %v2250 = vxor.u32 %v2248, 2147483648
    %v2251 = vxor.u32 %v2249, 2147483648
    %v2252 = vmul.f32 %v2250, 1.442695
    %v2253 = vpow.pop %v2252
    %v2254 = vmul.f32 %v2251, 1.442695
    %v2255 = vpow.pop %v2254
    %v2256 = vadd.f32 %v2253, 1.0
    %v2257 = vadd.f32 %v2255, 1.0
    %v2258 = vrcp.pop %v2256
    %v2259 = vmul.f32 1.0, %v2258
    %v2260 = vrcp.pop %v2257
    %v2261 = vmul.f32 1.0, %v2260
    %v2262 = vmul.f32 %v2259, %v2245
    %v2263 = vadd.f32 %v986, %v2262
    %v2264 = vtanh.pop %v2263
    %v2265 = vsub.f32 1.0, %v2261
    %v2266 = vmul.f32 %v2265, %v2264
    %v2267 = vmul.f32 %v2261, %v2106
    %v2268 = vadd.f32 %v2266, %v2267
    %2269 = vmatprep.subr.mxu0 %v49
    %2270 = vmatpush1.msra.mxu0 %v48
    %2271 = vmatprep.subr.mxu0 %v52
    %2272 = vmatpush1.msra.mxu0 %v51
    %2273 = vmatprep.subr.mxu0 %v55
    %2274 = vmatpush1.msra.mxu0 %v54
    %2275 = vmatprep.subr.mxu0 %v58
    %2276 = vmatpush1.msra.mxu0 %v57
    %2277 = vmatprep.subr.mxu0 %v61
    %2278 = vmatpush1.msra.mxu0 %v60
    %2279 = vmatprep.subr.mxu0 %v64
    %2280 = vmatpush1.msra.mxu0 %v63
    %2281 = vmatprep.subr.mxu0 %v67
    %2282 = vmatpush1.msra.mxu0 %v66
    %2283 = vmatprep.subr.mxu0 %v70
    %2284 = vmatpush1.msra.mxu0 %v69
    %2285 = vmatprep.subr.mxu0 %v73
    %2286 = vmatpush1.msra.mxu0 %v72
    %2287 = vmatprep.subr.mxu0 %v76
    %2288 = vmatpush1.msra.mxu0 %v75
    %2289 = vmatprep.subr.mxu0 %v79
    %2290 = vmatpush1.msra.mxu0 %v78
    %2291 = vmatprep.subr.mxu0 %v82
    %2292 = vmatpush1.msra.mxu0 %v81
    %2293 = vmatprep.subr.mxu0 %v85
    %2294 = vmatpush1.msra.mxu0 %v84
    %2295 = vmatprep.subr.mxu0 %v88
    %2296 = vmatpush1.msra.mxu0 %v87
    %2297 = vmatprep.subr.mxu0 %v91
    %2298 = vmatpush1.msra.mxu0 %v90
    %2299 = vmatprep.subr.mxu0 %v94
    %2300 = vmatpush1.msra.mxu0 %v93
    %2301 = vmatprep.subr.mxu0 0.0
    %2302 = vmatpush1.msra.mxu0 0.0
    %2303 = vmatprep.subr.mxu0 0.0
    %2304 = vmatpush1.msra.mxu0 0.0
    %2305 = vmatprep.subr.mxu0 0.0
    %2306 = vmatpush1.msra.mxu0 0.0
    %2307 = vmatprep.subr.mxu0 0.0
    %2308 = vmatpush1.msra.mxu0 0.0
    %2309 = vmatprep.subr.mxu0 0.0
    %2310 = vmatpush1.msra.mxu0 0.0
    %2311 = vmatprep.subr.mxu0 0.0
    %2312 = vmatpush1.msra.mxu0 0.0
    %2313 = vmatprep.subr.mxu0 0.0
    %2314 = vmatpush1.msra.mxu0 0.0
    %2315 = vmatprep.subr.mxu0 0.0
    %2316 = vmatpush1.msra.mxu0 0.0
    %2317 = vmatprep.subr.mxu0 0.0
    %2318 = vmatpush1.msra.mxu0 0.0
    %2319 = vmatprep.subr.mxu0 0.0
    %2320 = vmatpush1.msra.mxu0 0.0
    %2321 = vmatprep.subr.mxu0 0.0
    %2322 = vmatpush1.msra.mxu0 0.0
    %2323 = vmatprep.subr.mxu0 0.0
    %2324 = vmatpush1.msra.mxu0 0.0
    %2325 = vmatprep.subr.mxu0 0.0
    %2326 = vmatpush1.msra.mxu0 0.0
    %2327 = vmatprep.subr.mxu0 0.0
    %2328 = vmatpush1.msra.mxu0 0.0
    %2329 = vmatprep.subr.mxu0 0.0
    %2330 = vmatpush1.msra.mxu0 0.0
    %2331 = vmatprep.subr.mxu0 0.0
    %2332 = vmatpush1.msra.mxu0 0.0
    %2333 = vmatprep.mubr.f32.mxu0 0.0
    %2334 = vmatmul.mubr.f32.gmra.mrb[0].mxu0 %v2268
    %v2335 = vpop.f32.mrb[0].mxu0
    %v2336 = vadd.f32 %v1285, %v2335
    %v2337 = vpop.f32.mrb[0].mxu0
    %v2338 = vadd.f32 %v1289, %v2337
    %2339 = vdwg.mxu0
    %2340 = vmatprep.subr.mxu0 0.0
    %2341 = vmatpush1.msra.mxu0 %v50
    %2342 = vmatprep.subr.mxu0 0.0
    %2343 = vmatpush1.msra.mxu0 %v53
    %2344 = vmatprep.subr.mxu0 0.0
    %2345 = vmatpush1.msra.mxu0 %v56
    %2346 = vmatprep.subr.mxu0 0.0
    %2347 = vmatpush1.msra.mxu0 %v59
    %2348 = vmatprep.subr.mxu0 0.0
    %2349 = vmatpush1.msra.mxu0 %v62
    %2350 = vmatprep.subr.mxu0 0.0
    %2351 = vmatpush1.msra.mxu0 %v65
    %2352 = vmatprep.subr.mxu0 0.0
    %2353 = vmatpush1.msra.mxu0 %v68
    %2354 = vmatprep.subr.mxu0 0.0
    %2355 = vmatpush1.msra.mxu0 %v71
    %2356 = vmatprep.subr.mxu0 0.0
    %2357 = vmatpush1.msra.mxu0 %v74
    %2358 = vmatprep.subr.mxu0 0.0
    %2359 = vmatpush1.msra.mxu0 %v77
    %2360 = vmatprep.subr.mxu0 0.0
    %2361 = vmatpush1.msra.mxu0 %v80
    %2362 = vmatprep.subr.mxu0 0.0
    %2363 = vmatpush1.msra.mxu0 %v83
    %2364 = vmatprep.subr.mxu0 0.0
    %2365 = vmatpush1.msra.mxu0 %v86
    %2366 = vmatprep.subr.mxu0 0.0
    %2367 = vmatpush1.msra.mxu0 %v89
    %2368 = vmatprep.subr.mxu0 0.0
    %2369 = vmatpush1.msra.mxu0 %v92
    %2370 = vmatprep.subr.mxu0 0.0
    %2371 = vmatpush1.msra.mxu0 %v95
    %2372 = vmatprep.subr.mxu0 0.0
    %2373 = vmatpush1.msra.mxu0 0.0
    %2374 = vmatprep.subr.mxu0 0.0
    %2375 = vmatpush1.msra.mxu0 0.0
    %2376 = vmatprep.subr.mxu0 0.0
    %2377 = vmatpush1.msra.mxu0 0.0
    %2378 = vmatprep.subr.mxu0 0.0
    %2379 = vmatpush1.msra.mxu0 0.0
    %2380 = vmatprep.subr.mxu0 0.0
    %2381 = vmatpush1.msra.mxu0 0.0
    %2382 = vmatprep.subr.mxu0 0.0
    %2383 = vmatpush1.msra.mxu0 0.0
    %2384 = vmatprep.subr.mxu0 0.0
    %2385 = vmatpush1.msra.mxu0 0.0
    %2386 = vmatprep.subr.mxu0 0.0
    %2387 = vmatpush1.msra.mxu0 0.0
    %2388 = vmatprep.subr.mxu0 0.0
    %2389 = vmatpush1.msra.mxu0 0.0
    %2390 = vmatprep.subr.mxu0 0.0
    %2391 = vmatpush1.msra.mxu0 0.0
    %2392 = vmatprep.subr.mxu0 0.0
    %2393 = vmatpush1.msra.mxu0 0.0
    %2394 = vmatprep.subr.mxu0 0.0
    %2395 = vmatpush1.msra.mxu0 0.0
    %2396 = vmatprep.subr.mxu0 0.0
    %2397 = vmatpush1.msra.mxu0 0.0
    %2398 = vmatprep.subr.mxu0 0.0
    %2399 = vmatpush1.msra.mxu0 0.0
    %2400 = vmatprep.subr.mxu0 0.0
    %2401 = vmatpush1.msra.mxu0 0.0
    %2402 = vmatprep.subr.mxu0 0.0
    %2403 = vmatpush1.msra.mxu0 0.0
    %2404 = vmatprep.mubr.f32.mxu0 0.0
    %2405 = vmatmul.mubr.f32.gmra.mrb[0].mxu0 %v2268
    %v2406 = vpop.f32.mrb[0].mxu0
    %v2407 = vadd.f32 %v1293, %v2406
    %v2408 = vpop.f32.mrb[0].mxu0
    %2409 = vdwg.mxu0
    %v2410 = vadd.f32 %v1061, %v2336
    %v2411 = vadd.f32 %v1063, %v2338
    %v2412 = vxor.u32 %v2410, 2147483648
    %v2413 = vxor.u32 %v2411, 2147483648
    %v2414 = vmul.f32 %v2412, 1.442695
    %v2415 = vpow.pop %v2414
    %v2416 = vmul.f32 %v2413, 1.442695
    %v2417 = vpow.pop %v2416
    %v2418 = vadd.f32 %v2415, 1.0
    %v2419 = vadd.f32 %v2417, 1.0
    %v2420 = vrcp.pop %v2418
    %v2421 = vmul.f32 1.0, %v2420
    %v2422 = vrcp.pop %v2419
    %v2423 = vmul.f32 1.0, %v2422
    %v2424 = vmul.f32 %v2421, %v2407
    %v2425 = vadd.f32 %v1132, %v2424
    %v2426 = vtanh.pop %v2425
    %v2427 = vsub.f32 1.0, %v2423
    %v2428 = vmul.f32 %v2427, %v2426
    %v2429 = vmul.f32 %v2423, %v2268
    %v2430 = vadd.f32 %v2428, %v2429
    %2431 = vmatprep.subr.mxu0 %v49
    %2432 = vmatpush1.msra.mxu0 %v48
    %2433 = vmatprep.subr.mxu0 %v52
    %2434 = vmatpush1.msra.mxu0 %v51
    %2435 = vmatprep.subr.mxu0 %v55
    %2436 = vmatpush1.msra.mxu0 %v54
    %2437 = vmatprep.subr.mxu0 %v58
    %2438 = vmatpush1.msra.mxu0 %v57
    %2439 = vmatprep.subr.mxu0 %v61
    %2440 = vmatpush1.msra.mxu0 %v60
    %2441 = vmatprep.subr.mxu0 %v64
    %2442 = vmatpush1.msra.mxu0 %v63
    %2443 = vmatprep.subr.mxu0 %v67
    %2444 = vmatpush1.msra.mxu0 %v66
    %2445 = vmatprep.subr.mxu0 %v70
    %2446 = vmatpush1.msra.mxu0 %v69
    %2447 = vmatprep.subr.mxu0 %v73
    %2448 = vmatpush1.msra.mxu0 %v72
    %2449 = vmatprep.subr.mxu0 %v76
    %2450 = vmatpush1.msra.mxu0 %v75
    %2451 = vmatprep.subr.mxu0 %v79
    %2452 = vmatpush1.msra.mxu0 %v78
    %2453 = vmatprep.subr.mxu0 %v82
    %2454 = vmatpush1.msra.mxu0 %v81
    %2455 = vmatprep.subr.mxu0 %v85
    %2456 = vmatpush1.msra.mxu0 %v84
    %2457 = vmatprep.subr.mxu0 %v88
    %2458 = vmatpush1.msra.mxu0 %v87
    %2459 = vmatprep.subr.mxu0 %v91
    %2460 = vmatpush1.msra.mxu0 %v90
    %2461 = vmatprep.subr.mxu0 %v94
    %2462 = vmatpush1.msra.mxu0 %v93
    %2463 = vmatprep.subr.mxu0 0.0
    %2464 = vmatpush1.msra.mxu0 0.0
    %2465 = vmatprep.subr.mxu0 0.0
    %2466 = vmatpush1.msra.mxu0 0.0
    %2467 = vmatprep.subr.mxu0 0.0
    %2468 = vmatpush1.msra.mxu0 0.0
    %2469 = vmatprep.subr.mxu0 0.0
    %2470 = vmatpush1.msra.mxu0 0.0
    %2471 = vmatprep.subr.mxu0 0.0
    %2472 = vmatpush1.msra.mxu0 0.0
    %2473 = vmatprep.subr.mxu0 0.0
    %2474 = vmatpush1.msra.mxu0 0.0
    %2475 = vmatprep.subr.mxu0 0.0
    %2476 = vmatpush1.msra.mxu0 0.0
    %2477 = vmatprep.subr.mxu0 0.0
    %2478 = vmatpush1.msra.mxu0 0.0
    %2479 = vmatprep.subr.mxu0 0.0
    %2480 = vmatpush1.msra.mxu0 0.0
    %2481 = vmatprep.subr.mxu0 0.0
    %2482 = vmatpush1.msra.mxu0 0.0
    %2483 = vmatprep.subr.mxu0 0.0
    %2484 = vmatpush1.msra.mxu0 0.0
    %2485 = vmatprep.subr.mxu0 0.0
    %2486 = vmatpush1.msra.mxu0 0.0
    %2487 = vmatprep.subr.mxu0 0.0
    %2488 = vmatpush1.msra.mxu0 0.0
    %2489 = vmatprep.subr.mxu0 0.0
    %2490 = vmatpush1.msra.mxu0 0.0
    %2491 = vmatprep.subr.mxu0 0.0
    %2492 = vmatpush1.msra.mxu0 0.0
    %2493 = vmatprep.subr.mxu0 0.0
    %2494 = vmatpush1.msra.mxu0 0.0
    %2495 = vmatprep.mubr.f32.mxu0 0.0
    %2496 = vmatmul.mubr.f32.gmra.mrb[0].mxu0 %v2430
    %v2497 = vpop.f32.mrb[0].mxu0
    %v2498 = vadd.f32 %v1285, %v2497
    %v2499 = vpop.f32.mrb[0].mxu0
    %v2500 = vadd.f32 %v1289, %v2499
    %2501 = vdwg.mxu0
    %2502 = vmatprep.subr.mxu0 0.0
    %2503 = vmatpush1.msra.mxu0 %v50
    %2504 = vmatprep.subr.mxu0 0.0
    %2505 = vmatpush1.msra.mxu0 %v53
    %2506 = vmatprep.subr.mxu0 0.0
    %2507 = vmatpush1.msra.mxu0 %v56
    %2508 = vmatprep.subr.mxu0 0.0
    %2509 = vmatpush1.msra.mxu0 %v59
    %2510 = vmatprep.subr.mxu0 0.0
    %2511 = vmatpush1.msra.mxu0 %v62
    %2512 = vmatprep.subr.mxu0 0.0
    %2513 = vmatpush1.msra.mxu0 %v65
    %2514 = vmatprep.subr.mxu0 0.0
    %2515 = vmatpush1.msra.mxu0 %v68
    %2516 = vmatprep.subr.mxu0 0.0
    %2517 = vmatpush1.msra.mxu0 %v71
    %2518 = vmatprep.subr.mxu0 0.0
    %2519 = vmatpush1.msra.mxu0 %v74
    %2520 = vmatprep.subr.mxu0 0.0
    %2521 = vmatpush1.msra.mxu0 %v77
    %2522 = vmatprep.subr.mxu0 0.0
    %2523 = vmatpush1.msra.mxu0 %v80
    %2524 = vmatprep.subr.mxu0 0.0
    %2525 = vmatpush1.msra.mxu0 %v83
    %2526 = vmatprep.subr.mxu0 0.0
    %2527 = vmatpush1.msra.mxu0 %v86
    %2528 = vmatprep.subr.mxu0 0.0
    %2529 = vmatpush1.msra.mxu0 %v89
    %2530 = vmatprep.subr.mxu0 0.0
    %2531 = vmatpush1.msra.mxu0 %v92
    %2532 = vmatprep.subr.mxu0 0.0
    %2533 = vmatpush1.msra.mxu0 %v95
    %2534 = vmatprep.subr.mxu0 0.0
    %2535 = vmatpush1.msra.mxu0 0.0
    %2536 = vmatprep.subr.mxu0 0.0
    %2537 = vmatpush1.msra.mxu0 0.0
    %2538 = vmatprep.subr.mxu0 0.0
    %2539 = vmatpush1.msra.mxu0 0.0
    %2540 = vmatprep.subr.mxu0 0.0
    %2541 = vmatpush1.msra.mxu0 0.0
    %2542 = vmatprep.subr.mxu0 0.0
    %2543 = vmatpush1.msra.mxu0 0.0
    %2544 = vmatprep.subr.mxu0 0.0
    %2545 = vmatpush1.msra.mxu0 0.0
    %2546 = vmatprep.subr.mxu0 0.0
    %2547 = vmatpush1.msra.mxu0 0.0
    %2548 = vmatprep.subr.mxu0 0.0
    %2549 = vmatpush1.msra.mxu0 0.0
    %2550 = vmatprep.subr.mxu0 0.0
    %2551 = vmatpush1.msra.mxu0 0.0
    %2552 = vmatprep.subr.mxu0 0.0
    %2553 = vmatpush1.msra.mxu0 0.0
    %2554 = vmatprep.subr.mxu0 0.0
    %2555 = vmatpush1.msra.mxu0 0.0
    %2556 = vmatprep.subr.mxu0 0.0
    %2557 = vmatpush1.msra.mxu0 0.0
    %2558 = vmatprep.subr.mxu0 0.0
    %2559 = vmatpush1.msra.mxu0 0.0
    %2560 = vmatprep.subr.mxu0 0.0
    %2561 = vmatpush1.msra.mxu0 0.0
    %2562 = vmatprep.subr.mxu0 0.0
    %2563 = vmatpush1.msra.mxu0 0.0
    %2564 = vmatprep.subr.mxu0 0.0
    %2565 = vmatpush1.msra.mxu0 0.0
    %2566 = vmatprep.mubr.f32.mxu0 0.0
    %2567 = vmatmul.mubr.f32.gmra.mrb[0].mxu0 %v2430
    %v2568 = vpop.f32.mrb[0].mxu0
    %v2569 = vadd.f32 %v1293, %v2568
    %v2570 = vpop.f32.mrb[0].mxu0
    %2571 = vdwg.mxu0
    %v2572 = vadd.f32 %v1207, %v2498
    %v2573 = vadd.f32 %v1209, %v2500
    %v2574 = vxor.u32 %v2572, 2147483648
    %v2575 = vxor.u32 %v2573, 2147483648
    %v2576 = vmul.f32 %v2574, 1.442695
    %v2577 = vpow.pop %v2576
    %v2578 = vmul.f32 %v2575, 1.442695
    %v2579 = vpow.pop %v2578
    %v2580 = vadd.f32 %v2577, 1.0
    %v2581 = vadd.f32 %v2579, 1.0
    %v2582 = vrcp.pop %v2580
    %v2583 = vmul.f32 1.0, %v2582
    %v2584 = vrcp.pop %v2581
    %v2585 = vmul.f32 1.0, %v2584
    %v2586 = vmul.f32 %v2583, %v2569
    %v2587 = vadd.f32 %v1278, %v2586
    %v2588 = vtanh.pop %v2587
    %v2589 = vsub.f32 1.0, %v2585
    %v2590 = vmul.f32 %v2589, %v2588
    %v2591 = vmul.f32 %v2585, %v2430
    %v2592 = vadd.f32 %v2590, %v2591
    %v2593 = vld [vmem:[%s5] sm:$0xff]
    %v2594 = vld [vmem:[%s5 + $0x8] sm:$0xff]
    %v2595 = vld [vmem:[%s5 + $0x10] sm:$0xff]
    %v2596 = vld [vmem:[%s5 + $0x18] sm:$0xff]
    %v2597 = vld [vmem:[%s5 + $0x20] sm:$0xff]
    %v2598 = vld [vmem:[%s5 + $0x28] sm:$0xff]
    %v2599 = vld [vmem:[%s5 + $0x30] sm:$0xff]
    %v2600 = vld [vmem:[%s5 + $0x38] sm:$0xff]
    %v2601 = vld [vmem:[%s5 + $0x40] sm:$0xff]
    %v2602 = vld [vmem:[%s5 + $0x48] sm:$0xff]
    %v2603 = vld [vmem:[%s5 + $0x50] sm:$0xff]
    %v2604 = vld [vmem:[%s5 + $0x58] sm:$0xff]
    %v2605 = vld [vmem:[%s5 + $0x60] sm:$0xff]
    %v2606 = vld [vmem:[%s5 + $0x68] sm:$0xff]
    %v2607 = vld [vmem:[%s5 + $0x70] sm:$0xff]
    %v2608 = vld [vmem:[%s5 + $0x78] sm:$0xff]
    %v2609 = vld [vmem:[%s6] sm:$0x1]
    %v2611 = vlaneseq
    %v2612 = vshrl.u32 %v2611, 7
    %v2613 = vsub.s32 0, %v2612
    %v2614 = vrot.slane %v2609, %v2613
    %2616 = vmatprep.subr.mxu0 0.0
    %2617 = vmatpush1.msra.mxu0 %v2593
    %2618 = vmatprep.subr.mxu0 0.0
    %2619 = vmatpush1.msra.mxu0 %v2594
    %2620 = vmatprep.subr.mxu0 0.0
    %2621 = vmatpush1.msra.mxu0 %v2595
    %2622 = vmatprep.subr.mxu0 0.0
    %2623 = vmatpush1.msra.mxu0 %v2596
    %2624 = vmatprep.subr.mxu0 0.0
    %2625 = vmatpush1.msra.mxu0 %v2597
    %2626 = vmatprep.subr.mxu0 0.0
    %2627 = vmatpush1.msra.mxu0 %v2598
    %2628 = vmatprep.subr.mxu0 0.0
    %2629 = vmatpush1.msra.mxu0 %v2599
    %2630 = vmatprep.subr.mxu0 0.0
    %2631 = vmatpush1.msra.mxu0 %v2600
    %2632 = vmatprep.subr.mxu0 0.0
    %2633 = vmatpush1.msra.mxu0 %v2601
    %2634 = vmatprep.subr.mxu0 0.0
    %2635 = vmatpush1.msra.mxu0 %v2602
    %2636 = vmatprep.subr.mxu0 0.0
    %2637 = vmatpush1.msra.mxu0 %v2603
    %2638 = vmatprep.subr.mxu0 0.0
    %2639 = vmatpush1.msra.mxu0 %v2604
    %2640 = vmatprep.subr.mxu0 0.0
    %2641 = vmatpush1.msra.mxu0 %v2605
    %2642 = vmatprep.subr.mxu0 0.0
    %2643 = vmatpush1.msra.mxu0 %v2606
    %2644 = vmatprep.subr.mxu0 0.0
    %2645 = vmatpush1.msra.mxu0 %v2607
    %2646 = vmatprep.subr.mxu0 0.0
    %2647 = vmatpush1.msra.mxu0 %v2608
    %2648 = vmatprep.subr.mxu0 0.0
    %2649 = vmatpush1.msra.mxu0 0.0
    %2650 = vmatprep.subr.mxu0 0.0
    %2651 = vmatpush1.msra.mxu0 0.0
    %2652 = vmatprep.subr.mxu0 0.0
    %2653 = vmatpush1.msra.mxu0 0.0
    %2654 = vmatprep.subr.mxu0 0.0
    %2655 = vmatpush1.msra.mxu0 0.0
    %2656 = vmatprep.subr.mxu0 0.0
    %2657 = vmatpush1.msra.mxu0 0.0
    %2658 = vmatprep.subr.mxu0 0.0
    %2659 = vmatpush1.msra.mxu0 0.0
    %2660 = vmatprep.subr.mxu0 0.0
    %2661 = vmatpush1.msra.mxu0 0.0
    %2662 = vmatprep.subr.mxu0 0.0
    %2663 = vmatpush1.msra.mxu0 0.0
    %2664 = vmatprep.subr.mxu0 0.0
    %2665 = vmatpush1.msra.mxu0 0.0
    %2666 = vmatprep.subr.mxu0 0.0
    %2667 = vmatpush1.msra.mxu0 0.0
    %2668 = vmatprep.subr.mxu0 0.0
    %2669 = vmatpush1.msra.mxu0 0.0
    %2670 = vmatprep.subr.mxu0 0.0
    %2671 = vmatpush1.msra.mxu0 0.0
    %2672 = vmatprep.subr.mxu0 0.0
    %2673 = vmatpush1.msra.mxu0 0.0
    %2674 = vmatprep.subr.mxu0 0.0
    %2675 = vmatpush1.msra.mxu0 0.0
    %2676 = vmatprep.subr.mxu0 0.0
    %2677 = vmatpush1.msra.mxu0 0.0
    %2678 = vmatprep.subr.mxu0 0.0
    %2679 = vmatpush1.msra.mxu0 0.0
    %2680 = vmatprep.mubr.f32.mxu0 0.0
    %2681 = vmatmul.mubr.f32.gmra.mrb[0].mxu0 %v2592
    %v2682 = vpop.f32.mrb[0].mxu0
    %v2683 = vadd.f32 %v2614, %v2682
    %v2684 = vpop.f32.mrb[0].mxu0
    %2685 = vdwg.mxu0
    %vm2686 = vcmask 254976
    %2687 = vst.msk [vmem:[#allocation5] sm:$0x3] %vm2686, %v2683
    // Predicated region
    $region34: #{tpu_custom_call.1} parent=1 // pred_check
      _
    $region35: #{tpu_custom_call.1} parent=1 // pred_check_branch
      %2689 = sbr.rel (0) target = $region37
    $region36: #{tpu_custom_call.1} parent=1 // pred_region
      %s2691 = ssub.s32 32, 32
      %2692 = vsyncadd [#allocation4], %s2691
      %s2694 = sshll.u32 [#allocation5], 4
      %s2695 = int_to_ptr.vmem [resolvable:$true] %s2694
      %2697 = dma.vmem_to_hbm [thread:$0]  %s2695, 32, %s7, [#allocation4]
    $region37: #{tpu_custom_call.1} parent=1 // pred_fallthru
      _
    // Predicated region
    $region38: #{tpu_custom_call.1} parent=1 // pred_check
      _
    $region39: #{tpu_custom_call.1} parent=1 // pred_check_branch
      %2699 = sbr.rel (0) target = $region41
    $region40: #{tpu_custom_call.1} parent=1 // pred_region
      %2700 = dma.done [#allocation4], 32
    $region41: #{tpu_custom_call.1} parent=1 // pred_fallthru
      _
    %2701 = vsyncpa [#allocation3], 1
    %2702 = vsyncpa [#allocation4], 1

</llo_original>
